<compile_context>
chip_gen: v7x
topology: tpu7x:2x2x1
jax: 0.10.0
libtpu: 0.0.40
codegen_flags: <defaults>
</compile_context>

<pallas_src>
import jax
import jax.numpy as jnp
from jax import lax
from jax.experimental import pallas as pl
from jax.experimental.pallas import tpu as pltpu

BN_EPS = 1e-5


# ---------------------------------------------------------------------------
# Pallas kernel
# ---------------------------------------------------------------------------
def _make_kernel(H, W, Cin, P, N, extra):
    def kernel(*refs):
        if extra:
            (x_ref, m_ref, w1_ref, b1_ref, w2a, w2b, w2c, b2_ref,
             w3_ref, b3_ref, we_ref, be_ref, out_ref, a_ref) = refs
        else:
            (x_ref, m_ref, w1_ref, b1_ref, w2a, w2b, w2c, b2_ref,
             w3_ref, b3_ref, out_ref, a_ref) = refs
            we_ref = be_ref = None
        w2_refs = (w2a, w2b, w2c)

        x = x_ref[0]                                           # (Cin, N) bf16

        # ---- conv1 (1x1) + BN + ReLU: (P, Cin) @ (Cin, N) -> (P, N) ---------
        h1f = jnp.dot(w1_ref[...], x, preferred_element_type=jnp.float32)
        h1f = jnp.maximum(h1f + b1_ref[...], 0.0)              # f32 epilogue
        h1 = h1f.astype(jnp.bfloat16)                          # bf16 early

        # ---- conv2 (3x3, dilation=2, padding=2) + BN + ReLU ------------------
        # roll+mask im2col (bf16), taps stored into VMEM scratch, issued as
        # three accumulated MXU dots (K = 3P each) so roll/mask work overlaps
        # the matmul.
        h2 = None
        for c in range(3):
            for j in range(3):
                t = 3 * c + j
                kh, kw = divmod(t, 3)
                dh, dw = 2 * (kh - 1), 2 * (kw - 1)
                if dh == 0 and dw == 0:
                    tap = h1                                   # center tap
                else:
                    rolled = jnp.roll(h1, -(dh * W + dw), axis=1)
                    tap = rolled * m_ref[t]                    # (P,N)*(1,N) bf16
                a_ref[t * P:(t + 1) * P, :] = tap
            part = jnp.dot(w2_refs[c][...],
                           a_ref[3 * c * P:3 * (c + 1) * P, :],
                           preferred_element_type=jnp.float32)
            h2 = part if h2 is None else h2 + part
        h2 = jnp.maximum(h2 + b2_ref[...], 0.0)                # f32 epilogue

        # ---- conv3 (1x1) + BN -------------------------------------------------
        h3 = jnp.dot(w3_ref[...], h2.astype(jnp.bfloat16),
                     preferred_element_type=jnp.float32) + b3_ref[...]

        # ---- identity / extra 1x1 projection -----------------------------------
        if extra:
            ident = jnp.dot(we_ref[...], x,
                            preferred_element_type=jnp.float32) + be_ref[...]
        else:
            ident = x.astype(jnp.float32)                      # Cin == P

        out_ref[0] = jnp.maximum(h3 + ident, 0.0).astype(out_ref.dtype)

    return kernel


# ---------------------------------------------------------------------------
# Host-side helpers
# ---------------------------------------------------------------------------
def make_tap_masks(H, W, bt):
    """(9, 1, bt*H*W) bf16 {0,1} validity masks for the dilation-2 3x3 taps."""
    HW = H * W
    lane = jnp.arange(HW)
    hh = lane // W
    ww = lane % W
    rows = []
    for kh in range(3):
        for kw in range(3):
            dh, dw = 2 * (kh - 1), 2 * (kw - 1)
            valid = ((hh + dh >= 0) & (hh + dh < H) &
                     (ww + dw >= 0) & (ww + dw < W))
            rows.append(valid)
    m = jnp.stack(rows, axis=0).astype(jnp.bfloat16)           # (9, HW)
    return jnp.tile(m, (1, bt)).reshape(9, 1, bt * HW)


# ---------------------------------------------------------------------------
# Wrapper
# ---------------------------------------------------------------------------
def detnet_bottleneck_pallas(x_nchw, params, extra, *, bt=1):
    B, Cin, H, W = x_nchw.shape
    P = params["w1"].shape[0]
    if not extra:
        assert Cin == P, "identity path requires in_planes == planes"
    assert B % bt == 0, "batch must be divisible by the packing factor bt"
    G = B // bt
    HW = H * W
    N = bt * HW

    # NCHW -> (G, Cin, bt*HW): channels on sublanes, packed spatial on lanes.
    x = (x_nchw.reshape(G, bt, Cin, HW)
               .transpose(0, 2, 1, 3)
               .reshape(G, Cin, N)
               .astype(jnp.bfloat16))
    masks = make_tap_masks(H, W, bt)

    def full(a):
        zeros = (0,) * a.ndim
        return pl.BlockSpec(a.shape, lambda g: zeros)

    args = [x, masks, params["w1"], params["b1"],
            *params["w2c"], params["b2"], params["w3"], params["b3"]]
    in_specs = [pl.BlockSpec((1, Cin, N), lambda g: (g, 0, 0))]
    in_specs += [full(a) for a in args[1:]]
    if extra:
        args += [params["we"], params["be"]]
        in_specs += [full(params["we"]), full(params["be"])]

    # Per-step live-set estimate (double-buffered x/out, im2col scratch, f32
    # intermediates, constant weight blocks); clamp to 48 MiB for v7x's 64 MiB VMEM.
    const_bytes = sum(int(a.size) * a.dtype.itemsize for a in args[1:])
    est = (2 * Cin * N * 2 + 2 * P * N * 2 + 9 * P * N * 2
           + 6 * P * N * 4 + 2 * const_bytes)
    vmem_limit = int(min(max(4 * est, 32 << 20), 48 << 20))

    out = pl.pallas_call(
        _make_kernel(H, W, Cin, P, N, extra),
        out_shape=jax.ShapeDtypeStruct((G, P, N), jnp.bfloat16),
        grid_spec=pltpu.PrefetchScalarGridSpec(
            num_scalar_prefetch=0,
            grid=(G,),
            in_specs=in_specs,
            out_specs=pl.BlockSpec((1, P, N), lambda g: (g, 0, 0)),
            scratch_shapes=[pltpu.VMEM((9 * P, N), jnp.bfloat16)]),
        compiler_params=pltpu.CompilerParams(
            dimension_semantics=("parallel",),
            vmem_limit_bytes=vmem_limit),
    )(*args)

    # (G, P, bt*HW) -> (B, P, H, W)
    return (out.reshape(G, P, bt, HW)
               .transpose(0, 2, 1, 3)
               .reshape(B, P, H, W))


# ---------------------------------------------------------------------------
# Parameter construction (PyTorch-style raw params + BN folding)
# ---------------------------------------------------------------------------
def make_raw_params(key, in_planes, planes, extra):
    keys = iter(jax.random.split(key, 24))

    def conv(shape):
        fan_in = shape[1] * shape[2] * shape[3]
        return (jax.random.normal(next(keys), shape, jnp.float32)
                * (1.0 / fan_in) ** 0.5)

    def bn(c):
        return dict(
            gamma=jax.random.uniform(next(keys), (c,), jnp.float32, 0.75, 1.25),
            beta=0.1 * jax.random.normal(next(keys), (c,), jnp.float32),
            mean=0.1 * jax.random.normal(next(keys), (c,), jnp.float32),
            var=jax.random.uniform(next(keys), (c,), jnp.float32, 0.75, 1.25))

    raw = dict(w1=conv((planes, in_planes, 1, 1)), bn1=bn(planes),
               w2=conv((planes, planes, 3, 3)),    bn2=bn(planes),
               w3=conv((planes, planes, 1, 1)),    bn3=bn(planes))
    if extra:
        raw.update(we=conv((planes, in_planes, 1, 1)), bne=bn(planes))
    return raw


def fold_params(raw, extra):
    """Fold inference-mode BatchNorm into conv weights; convert to kernel layouts."""

    def fold(w_oihw, bn):
        s = bn["gamma"] / jnp.sqrt(bn["var"] + BN_EPS)           # (Cout,)
        w = w_oihw * s[:, None, None, None]
        b = (bn["beta"] - bn["mean"] * s)[:, None]               # (Cout, 1)
        return w, b.astype(jnp.float32)

    w1, b1 = fold(raw["w1"], raw["bn1"])
    w2, b2 = fold(raw["w2"], raw["bn2"])
    w3, b3 = fold(raw["w3"], raw["bn3"])
    p_out, p_in = w2.shape[0], w2.shape[1]
    # im2col weight layout: column index = (kh*3 + kw) * P_in + cin,
    # split into three K-chunks of 3 taps each (matches the chunked MXU dots).
    w2_flat = jnp.transpose(w2, (0, 2, 3, 1)).reshape(p_out, 9 * p_in)
    w2c = tuple(w2_flat[:, 3 * c * p_in:3 * (c + 1) * p_in].astype(jnp.bfloat16)
                for c in range(3))

    params = dict(
        w1=w1[:, :, 0, 0].astype(jnp.bfloat16),                  # (P, Cin)
        b1=b1,
        w2c=w2c,                                                 # 3 x (P, 3P)
        b2=b2,
        w3=w3[:, :, 0, 0].astype(jnp.bfloat16),                  # (P, P)
        b3=b3,
    )
    if extra:
        we, be = fold(raw["we"], raw["bne"])
        params.update(we=we[:, :, 0, 0].astype(jnp.bfloat16), be=be)
    return params


# ---------------------------------------------------------------------------
# Pure-JAX reference (full f32, unfolded BN) for correctness check
# ---------------------------------------------------------------------------
def reference(x_nchw, raw, extra):
    def bn(y, p):
        s = p["gamma"] / jnp.sqrt(p["var"] + BN_EPS)
        return ((y - p["mean"][None, :, None, None]) * s[None, :, None, None]
                + p["beta"][None, :, None, None])

    def conv(y, w, padding=0, dilation=1):
        return lax.conv_general_dilated(
            y, w, window_strides=(1, 1),
            padding=((padding, padding), (padding, padding)),
            rhs_dilation=(dilation, dilation),
            dimension_numbers=("NCHW", "OIHW", "NCHW"))

    h = jax.nn.relu(bn(conv(x_nchw, raw["w1"]), raw["bn1"]))
    h = jax.nn.relu(bn(conv(h, raw["w2"], padding=2, dilation=2), raw["bn2"]))
    h = bn(conv(h, raw["w3"]), raw["bn3"])
    ident = bn(conv(x_nchw, raw["we"]), raw["bne"]) if extra else x_nchw
    return jax.nn.relu(h + ident)


# ---------------------------------------------------------------------------
if __name__ == "__main__":
    B, C_IN, H, W = 2, 4, 16, 16
    PLANES = 16     # multiple of 16 keeps the bf16 im2col scratch sublane-aligned
    EXTRA = True    # Cin != planes -> extra 1x1 projection on the identity path

    key = jax.random.PRNGKey(0)
    kx, kp = jax.random.split(key)
    x_nchw = jax.random.normal(kx, (B, C_IN, H, W), jnp.float32)

    raw = make_raw_params(kp, C_IN, PLANES, EXTRA)
    params = fold_params(raw, EXTRA)

    # bt=1 keeps 2 parallel grid steps (one per v7x TensorCore) for B=2;
    # production shapes should raise bt so bt*H*W is a multiple of 256.
    out = detnet_bottleneck_pallas(x_nchw, params, EXTRA, bt=1)
    out = jax.block_until_ready(out)

    ref = reference(x_nchw, raw, EXTRA)
    assert out.shape == (B, PLANES, H, W)
    outf = out.astype(jnp.float32)
    # bf16 MXU operands / bf16 output vs full-f32 reference -> loosened tolerance.
    err = float(jnp.max(jnp.abs(outf - ref)))
    assert jnp.allclose(outf, ref, atol=5e-2, rtol=5e-2), err
    print("KERNEL_OK")
</pallas_src>

<mosaic_0001>
module attributes {stable_mosaic.version = 11 : i64} {
  func.func @kernel(%arg0: i32, %arg1: memref<1x4x256xbf16, #tpu.memory_space<vmem>>, %arg2: memref<9x1x256xbf16, #tpu.memory_space<vmem>>, %arg3: memref<16x4xbf16, #tpu.memory_space<vmem>>, %arg4: memref<16x1xf32, #tpu.memory_space<vmem>>, %arg5: memref<16x48xbf16, #tpu.memory_space<vmem>>, %arg6: memref<16x48xbf16, #tpu.memory_space<vmem>>, %arg7: memref<16x48xbf16, #tpu.memory_space<vmem>>, %arg8: memref<16x1xf32, #tpu.memory_space<vmem>>, %arg9: memref<16x16xbf16, #tpu.memory_space<vmem>>, %arg10: memref<16x1xf32, #tpu.memory_space<vmem>>, %arg11: memref<16x4xbf16, #tpu.memory_space<vmem>>, %arg12: memref<16x1xf32, #tpu.memory_space<vmem>>, %arg13: memref<1x16x256xbf16, #tpu.memory_space<vmem>>, %arg14: memref<144x256xbf16, #tpu.memory_space<vmem>>) attributes {dimension_semantics = [#tpu.dimension_semantics<parallel>], iteration_bounds = array<i64: 2>, scalar_prefetch = 0 : i64, scratch_operands = 1 : i64, tpu.core_type = #tpu.core_type<tc>, window_params = [{transform_indices = @transform_0, window_bounds = array<i64: 1, 4, 256>}, {pipeline_mode = #tpu.pipeline_mode<synchronous>, transform_indices = @transform_1, window_bounds = array<i64: 9, 1, 256>}, {pipeline_mode = #tpu.pipeline_mode<synchronous>, transform_indices = @transform_2, window_bounds = array<i64: 16, 4>}, {pipeline_mode = #tpu.pipeline_mode<synchronous>, transform_indices = @transform_3, window_bounds = array<i64: 16, 1>}, {pipeline_mode = #tpu.pipeline_mode<synchronous>, transform_indices = @transform_4, window_bounds = array<i64: 16, 48>}, {pipeline_mode = #tpu.pipeline_mode<synchronous>, transform_indices = @transform_5, window_bounds = array<i64: 16, 48>}, {pipeline_mode = #tpu.pipeline_mode<synchronous>, transform_indices = @transform_6, window_bounds = array<i64: 16, 48>}, {pipeline_mode = #tpu.pipeline_mode<synchronous>, transform_indices = @transform_7, window_bounds = array<i64: 16, 1>}, {pipeline_mode = #tpu.pipeline_mode<synchronous>, transform_indices = @transform_8, window_bounds = array<i64: 16, 16>}, {pipeline_mode = #tpu.pipeline_mode<synchronous>, transform_indices = @transform_9, window_bounds = array<i64: 16, 1>}, {pipeline_mode = #tpu.pipeline_mode<synchronous>, transform_indices = @transform_10, window_bounds = array<i64: 16, 4>}, {pipeline_mode = #tpu.pipeline_mode<synchronous>, transform_indices = @transform_11, window_bounds = array<i64: 16, 1>}, {transform_indices = @transform_12, window_bounds = array<i64: 1, 16, 256>}]} {
    %c0 = arith.constant 0 : index
    %c0_0 = arith.constant 0 : index
    %c0_1 = arith.constant 0 : index
    %0 = vector.load %arg1[%c0, %c0_0, %c0_1] : memref<1x4x256xbf16, #tpu.memory_space<vmem>>, vector<1x4x256xbf16>
    %1 = vector.shape_cast %0 : vector<1x4x256xbf16> to vector<4x256xbf16>
    %c0_2 = arith.constant 0 : index
    %c0_3 = arith.constant 0 : index
    %2 = vector.load %arg3[%c0_2, %c0_3] : memref<16x4xbf16, #tpu.memory_space<vmem>>, vector<16x4xbf16>
    %cst = arith.constant dense<0.000000e+00> : vector<16x256xf32>
    %3 = tpu.matmul %2, %1, %cst {dimension_numbers = #tpu.dot_dimension_numbers<[1], [0], [0], [1], [0, 0, 1, 1], [], []>} : vector<16x4xbf16>, vector<4x256xbf16>, vector<16x256xf32> -> vector<16x256xf32>
    %c0_4 = arith.constant 0 : index
    %c0_5 = arith.constant 0 : index
    %4 = vector.load %arg4[%c0_4, %c0_5] : memref<16x1xf32, #tpu.memory_space<vmem>>, vector<16x1xf32>
    %5 = vector.broadcast %4 : vector<16x1xf32> to vector<16x256xf32>
    %6 = arith.addf %3, %5 : vector<16x256xf32>
    %cst_6 = arith.constant 0.000000e+00 : f32
    %7 = vector.broadcast %cst_6 : f32 to vector<16x256xf32>
    %8 = arith.maximumf %6, %7 : vector<16x256xf32>
    %9 = arith.truncf %8 : vector<16x256xf32> to vector<16x256xbf16>
    %10 = vector.extract_strided_slice %9 {offsets = [0, 222], sizes = [16, 34], strides = [1, 1]} : vector<16x256xbf16> to vector<16x34xbf16>
    %11 = vector.extract_strided_slice %9 {offsets = [0, 0], sizes = [16, 222], strides = [1, 1]} : vector<16x256xbf16> to vector<16x222xbf16>
    %12 = tpu.concatenate %10, %11 in 1 : vector<16x34xbf16>, vector<16x222xbf16> -> vector<16x256xbf16>
    %c0_7 = arith.constant 0 : index
    %c0_8 = arith.constant 0 : index
    %c0_9 = arith.constant 0 : index
    %13 = vector.load %arg2[%c0_7, %c0_8, %c0_9] : memref<9x1x256xbf16, #tpu.memory_space<vmem>>, vector<1x1x256xbf16>
    %14 = vector.shape_cast %13 : vector<1x1x256xbf16> to vector<1x256xbf16>
    %15 = vector.broadcast %14 : vector<1x256xbf16> to vector<16x256xbf16>
    %16 = arith.mulf %12, %15 : vector<16x256xbf16>
    %c0_10 = arith.constant 0 : index
    %c0_11 = arith.constant 0 : index
    %17 = vector.load %arg14[%c0_10, %c0_11] : memref<144x256xbf16, #tpu.memory_space<vmem>>, vector<16x256xbf16>
    tpu.vector_store %arg14[%c0_10, %c0_11], %16 {strides = array<i32>} : memref<144x256xbf16, #tpu.memory_space<vmem>>, vector<16x256xbf16>,
    %18 = vector.extract_strided_slice %9 {offsets = [0, 224], sizes = [16, 32], strides = [1, 1]} : vector<16x256xbf16> to vector<16x32xbf16>
    %19 = vector.extract_strided_slice %9 {offsets = [0, 0], sizes = [16, 224], strides = [1, 1]} : vector<16x256xbf16> to vector<16x224xbf16>
    %20 = tpu.concatenate %18, %19 in 1 : vector<16x32xbf16>, vector<16x224xbf16> -> vector<16x256xbf16>
    %c1 = arith.constant 1 : index
    %c0_12 = arith.constant 0 : index
    %c0_13 = arith.constant 0 : index
    %21 = vector.load %arg2[%c1, %c0_12, %c0_13] : memref<9x1x256xbf16, #tpu.memory_space<vmem>>, vector<1x1x256xbf16>
    %22 = vector.shape_cast %21 : vector<1x1x256xbf16> to vector<1x256xbf16>
    %23 = vector.broadcast %22 : vector<1x256xbf16> to vector<16x256xbf16>
    %24 = arith.mulf %20, %23 : vector<16x256xbf16>
    %c16 = arith.constant 16 : index
    %c0_14 = arith.constant 0 : index
    %25 = vector.load %arg14[%c16, %c0_14] : memref<144x256xbf16, #tpu.memory_space<vmem>>, vector<16x256xbf16>
    tpu.vector_store %arg14[%c16, %c0_14], %24 {strides = array<i32>} : memref<144x256xbf16, #tpu.memory_space<vmem>>, vector<16x256xbf16>,
    %26 = vector.extract_strided_slice %9 {offsets = [0, 226], sizes = [16, 30], strides = [1, 1]} : vector<16x256xbf16> to vector<16x30xbf16>
    %27 = vector.extract_strided_slice %9 {offsets = [0, 0], sizes = [16, 226], strides = [1, 1]} : vector<16x256xbf16> to vector<16x226xbf16>
    %28 = tpu.concatenate %26, %27 in 1 : vector<16x30xbf16>, vector<16x226xbf16> -> vector<16x256xbf16>
    %c2 = arith.constant 2 : index
    %c0_15 = arith.constant 0 : index
    %c0_16 = arith.constant 0 : index
    %29 = vector.load %arg2[%c2, %c0_15, %c0_16] : memref<9x1x256xbf16, #tpu.memory_space<vmem>>, vector<1x1x256xbf16>
    %30 = vector.shape_cast %29 : vector<1x1x256xbf16> to vector<1x256xbf16>
    %31 = vector.broadcast %30 : vector<1x256xbf16> to vector<16x256xbf16>
    %32 = arith.mulf %28, %31 : vector<16x256xbf16>
    %c32 = arith.constant 32 : index
    %c0_17 = arith.constant 0 : index
    %33 = vector.load %arg14[%c32, %c0_17] : memref<144x256xbf16, #tpu.memory_space<vmem>>, vector<16x256xbf16>
    tpu.vector_store %arg14[%c32, %c0_17], %32 {strides = array<i32>} : memref<144x256xbf16, #tpu.memory_space<vmem>>, vector<16x256xbf16>,
    %c0_18 = arith.constant 0 : index
    %c0_19 = arith.constant 0 : index
    %34 = vector.load %arg5[%c0_18, %c0_19] : memref<16x48xbf16, #tpu.memory_space<vmem>>, vector<16x48xbf16>
    %c0_20 = arith.constant 0 : index
    %c0_21 = arith.constant 0 : index
    %35 = vector.load %arg14[%c0_20, %c0_21] : memref<144x256xbf16, #tpu.memory_space<vmem>>, vector<48x256xbf16>
    %cst_22 = arith.constant dense<0.000000e+00> : vector<16x256xf32>
    %36 = tpu.matmul %34, %35, %cst_22 {dimension_numbers = #tpu.dot_dimension_numbers<[1], [0], [0], [1], [0, 0, 1, 1], [], []>} : vector<16x48xbf16>, vector<48x256xbf16>, vector<16x256xf32> -> vector<16x256xf32>
    %37 = vector.extract_strided_slice %9 {offsets = [0, 254], sizes = [16, 2], strides = [1, 1]} : vector<16x256xbf16> to vector<16x2xbf16>
    %38 = vector.extract_strided_slice %9 {offsets = [0, 0], sizes = [16, 254], strides = [1, 1]} : vector<16x256xbf16> to vector<16x254xbf16>
    %39 = tpu.concatenate %37, %38 in 1 : vector<16x2xbf16>, vector<16x254xbf16> -> vector<16x256xbf16>
    %c3 = arith.constant 3 : index
    %c0_23 = arith.constant 0 : index
    %c0_24 = arith.constant 0 : index
    %40 = vector.load %arg2[%c3, %c0_23, %c0_24] : memref<9x1x256xbf16, #tpu.memory_space<vmem>>, vector<1x1x256xbf16>
    %41 = vector.shape_cast %40 : vector<1x1x256xbf16> to vector<1x256xbf16>
    %42 = vector.broadcast %41 : vector<1x256xbf16> to vector<16x256xbf16>
    %43 = arith.mulf %39, %42 : vector<16x256xbf16>
    %c48 = arith.constant 48 : index
    %c0_25 = arith.constant 0 : index
    %44 = vector.load %arg14[%c48, %c0_25] : memref<144x256xbf16, #tpu.memory_space<vmem>>, vector<16x256xbf16>
    tpu.vector_store %arg14[%c48, %c0_25], %43 {strides = array<i32>} : memref<144x256xbf16, #tpu.memory_space<vmem>>, vector<16x256xbf16>,
    %c64 = arith.constant 64 : index
    %c0_26 = arith.constant 0 : index
    %45 = vector.load %arg14[%c64, %c0_26] : memref<144x256xbf16, #tpu.memory_space<vmem>>, vector<16x256xbf16>
    tpu.vector_store %arg14[%c64, %c0_26], %9 {strides = array<i32>} : memref<144x256xbf16, #tpu.memory_space<vmem>>, vector<16x256xbf16>,
    %46 = vector.extract_strided_slice %9 {offsets = [0, 2], sizes = [16, 254], strides = [1, 1]} : vector<16x256xbf16> to vector<16x254xbf16>
    %47 = vector.extract_strided_slice %9 {offsets = [0, 0], sizes = [16, 2], strides = [1, 1]} : vector<16x256xbf16> to vector<16x2xbf16>
    %48 = tpu.concatenate %46, %47 in 1 : vector<16x254xbf16>, vector<16x2xbf16> -> vector<16x256xbf16>
    %c5 = arith.constant 5 : index
    %c0_27 = arith.constant 0 : index
    %c0_28 = arith.constant 0 : index
    %49 = vector.load %arg2[%c5, %c0_27, %c0_28] : memref<9x1x256xbf16, #tpu.memory_space<vmem>>, vector<1x1x256xbf16>
    %50 = vector.shape_cast %49 : vector<1x1x256xbf16> to vector<1x256xbf16>
    %51 = vector.broadcast %50 : vector<1x256xbf16> to vector<16x256xbf16>
    %52 = arith.mulf %48, %51 : vector<16x256xbf16>
    %c80 = arith.constant 80 : index
    %c0_29 = arith.constant 0 : index
    %53 = vector.load %arg14[%c80, %c0_29] : memref<144x256xbf16, #tpu.memory_space<vmem>>, vector<16x256xbf16>
    tpu.vector_store %arg14[%c80, %c0_29], %52 {strides = array<i32>} : memref<144x256xbf16, #tpu.memory_space<vmem>>, vector<16x256xbf16>,
    %c0_30 = arith.constant 0 : index
    %c0_31 = arith.constant 0 : index
    %54 = vector.load %arg6[%c0_30, %c0_31] : memref<16x48xbf16, #tpu.memory_space<vmem>>, vector<16x48xbf16>
    %c48_32 = arith.constant 48 : index
    %c0_33 = arith.constant 0 : index
    %55 = vector.load %arg14[%c48_32, %c0_33] : memref<144x256xbf16, #tpu.memory_space<vmem>>, vector<48x256xbf16>
    %cst_34 = arith.constant dense<0.000000e+00> : vector<16x256xf32>
    %56 = tpu.matmul %54, %55, %cst_34 {dimension_numbers = #tpu.dot_dimension_numbers<[1], [0], [0], [1], [0, 0, 1, 1], [], []>} : vector<16x48xbf16>, vector<48x256xbf16>, vector<16x256xf32> -> vector<16x256xf32>
    %57 = arith.addf %36, %56 : vector<16x256xf32>
    %58 = vector.extract_strided_slice %9 {offsets = [0, 30], sizes = [16, 226], strides = [1, 1]} : vector<16x256xbf16> to vector<16x226xbf16>
    %59 = vector.extract_strided_slice %9 {offsets = [0, 0], sizes = [16, 30], strides = [1, 1]} : vector<16x256xbf16> to vector<16x30xbf16>
    %60 = tpu.concatenate %58, %59 in 1 : vector<16x226xbf16>, vector<16x30xbf16> -> vector<16x256xbf16>
    %c6 = arith.constant 6 : index
    %c0_35 = arith.constant 0 : index
    %c0_36 = arith.constant 0 : index
    %61 = vector.load %arg2[%c6, %c0_35, %c0_36] : memref<9x1x256xbf16, #tpu.memory_space<vmem>>, vector<1x1x256xbf16>
    %62 = vector.shape_cast %61 : vector<1x1x256xbf16> to vector<1x256xbf16>
    %63 = vector.broadcast %62 : vector<1x256xbf16> to vector<16x256xbf16>
    %64 = arith.mulf %60, %63 : vector<16x256xbf16>
    %c96 = arith.constant 96 : index
    %c0_37 = arith.constant 0 : index
    %65 = vector.load %arg14[%c96, %c0_37] : memref<144x256xbf16, #tpu.memory_space<vmem>>, vector<16x256xbf16>
    tpu.vector_store %arg14[%c96, %c0_37], %64 {strides = array<i32>} : memref<144x256xbf16, #tpu.memory_space<vmem>>, vector<16x256xbf16>,
    %66 = vector.extract_strided_slice %9 {offsets = [0, 32], sizes = [16, 224], strides = [1, 1]} : vector<16x256xbf16> to vector<16x224xbf16>
    %67 = vector.extract_strided_slice %9 {offsets = [0, 0], sizes = [16, 32], strides = [1, 1]} : vector<16x256xbf16> to vector<16x32xbf16>
    %68 = tpu.concatenate %66, %67 in 1 : vector<16x224xbf16>, vector<16x32xbf16> -> vector<16x256xbf16>
    %c7 = arith.constant 7 : index
    %c0_38 = arith.constant 0 : index
    %c0_39 = arith.constant 0 : index
    %69 = vector.load %arg2[%c7, %c0_38, %c0_39] : memref<9x1x256xbf16, #tpu.memory_space<vmem>>, vector<1x1x256xbf16>
    %70 = vector.shape_cast %69 : vector<1x1x256xbf16> to vector<1x256xbf16>
    %71 = vector.broadcast %70 : vector<1x256xbf16> to vector<16x256xbf16>
    %72 = arith.mulf %68, %71 : vector<16x256xbf16>
    %c112 = arith.constant 112 : index
    %c0_40 = arith.constant 0 : index
    %73 = vector.load %arg14[%c112, %c0_40] : memref<144x256xbf16, #tpu.memory_space<vmem>>, vector<16x256xbf16>
    tpu.vector_store %arg14[%c112, %c0_40], %72 {strides = array<i32>} : memref<144x256xbf16, #tpu.memory_space<vmem>>, vector<16x256xbf16>,
    %74 = vector.extract_strided_slice %9 {offsets = [0, 34], sizes = [16, 222], strides = [1, 1]} : vector<16x256xbf16> to vector<16x222xbf16>
    %75 = vector.extract_strided_slice %9 {offsets = [0, 0], sizes = [16, 34], strides = [1, 1]} : vector<16x256xbf16> to vector<16x34xbf16>
    %76 = tpu.concatenate %74, %75 in 1 : vector<16x222xbf16>, vector<16x34xbf16> -> vector<16x256xbf16>
    %c8 = arith.constant 8 : index
    %c0_41 = arith.constant 0 : index
    %c0_42 = arith.constant 0 : index
    %77 = vector.load %arg2[%c8, %c0_41, %c0_42] : memref<9x1x256xbf16, #tpu.memory_space<vmem>>, vector<1x1x256xbf16>
    %78 = vector.shape_cast %77 : vector<1x1x256xbf16> to vector<1x256xbf16>
    %79 = vector.broadcast %78 : vector<1x256xbf16> to vector<16x256xbf16>
    %80 = arith.mulf %76, %79 : vector<16x256xbf16>
    %c128 = arith.constant 128 : index
    %c0_43 = arith.constant 0 : index
    %81 = vector.load %arg14[%c128, %c0_43] : memref<144x256xbf16, #tpu.memory_space<vmem>>, vector<16x256xbf16>
    tpu.vector_store %arg14[%c128, %c0_43], %80 {strides = array<i32>} : memref<144x256xbf16, #tpu.memory_space<vmem>>, vector<16x256xbf16>,
    %c0_44 = arith.constant 0 : index
    %c0_45 = arith.constant 0 : index
    %82 = vector.load %arg7[%c0_44, %c0_45] : memref<16x48xbf16, #tpu.memory_space<vmem>>, vector<16x48xbf16>
    %c96_46 = arith.constant 96 : index
    %c0_47 = arith.constant 0 : index
    %83 = vector.load %arg14[%c96_46, %c0_47] : memref<144x256xbf16, #tpu.memory_space<vmem>>, vector<48x256xbf16>
    %cst_48 = arith.constant dense<0.000000e+00> : vector<16x256xf32>
    %84 = tpu.matmul %82, %83, %cst_48 {dimension_numbers = #tpu.dot_dimension_numbers<[1], [0], [0], [1], [0, 0, 1, 1], [], []>} : vector<16x48xbf16>, vector<48x256xbf16>, vector<16x256xf32> -> vector<16x256xf32>
    %85 = arith.addf %57, %84 : vector<16x256xf32>
    %c0_49 = arith.constant 0 : index
    %c0_50 = arith.constant 0 : index
    %86 = vector.load %arg8[%c0_49, %c0_50] : memref<16x1xf32, #tpu.memory_space<vmem>>, vector<16x1xf32>
    %87 = vector.broadcast %86 : vector<16x1xf32> to vector<16x256xf32>
    %88 = arith.addf %85, %87 : vector<16x256xf32>
    %cst_51 = arith.constant 0.000000e+00 : f32
    %89 = vector.broadcast %cst_51 : f32 to vector<16x256xf32>
    %90 = arith.maximumf %88, %89 : vector<16x256xf32>
    %c0_52 = arith.constant 0 : index
    %c0_53 = arith.constant 0 : index
    %91 = vector.load %arg9[%c0_52, %c0_53] : memref<16x16xbf16, #tpu.memory_space<vmem>>, vector<16x16xbf16>
    %92 = arith.truncf %90 : vector<16x256xf32> to vector<16x256xbf16>
    %cst_54 = arith.constant dense<0.000000e+00> : vector<16x256xf32>
    %93 = tpu.matmul %91, %92, %cst_54 {dimension_numbers = #tpu.dot_dimension_numbers<[1], [0], [0], [1], [0, 0, 1, 1], [], []>} : vector<16x16xbf16>, vector<16x256xbf16>, vector<16x256xf32> -> vector<16x256xf32>
    %c0_55 = arith.constant 0 : index
    %c0_56 = arith.constant 0 : index
    %94 = vector.load %arg10[%c0_55, %c0_56] : memref<16x1xf32, #tpu.memory_space<vmem>>, vector<16x1xf32>
    %95 = vector.broadcast %94 : vector<16x1xf32> to vector<16x256xf32>
    %96 = arith.addf %93, %95 : vector<16x256xf32>
    %c0_57 = arith.constant 0 : index
    %c0_58 = arith.constant 0 : index
    %97 = vector.load %arg11[%c0_57, %c0_58] : memref<16x4xbf16, #tpu.memory_space<vmem>>, vector<16x4xbf16>
    %cst_59 = arith.constant dense<0.000000e+00> : vector<16x256xf32>
    %98 = tpu.matmul %97, %1, %cst_59 {dimension_numbers = #tpu.dot_dimension_numbers<[1], [0], [0], [1], [0, 0, 1, 1], [], []>} : vector<16x4xbf16>, vector<4x256xbf16>, vector<16x256xf32> -> vector<16x256xf32>
    %c0_60 = arith.constant 0 : index
    %c0_61 = arith.constant 0 : index
    %99 = vector.load %arg12[%c0_60, %c0_61] : memref<16x1xf32, #tpu.memory_space<vmem>>, vector<16x1xf32>
    %100 = vector.broadcast %99 : vector<16x1xf32> to vector<16x256xf32>
    %101 = arith.addf %98, %100 : vector<16x256xf32>
    %102 = arith.addf %96, %101 : vector<16x256xf32>
    %cst_62 = arith.constant 0.000000e+00 : f32
    %103 = vector.broadcast %cst_62 : f32 to vector<16x256xf32>
    %104 = arith.maximumf %102, %103 : vector<16x256xf32>
    %105 = arith.truncf %104 : vector<16x256xf32> to vector<16x256xbf16>
    %c0_63 = arith.constant 0 : index
    %c0_64 = arith.constant 0 : index
    %c0_65 = arith.constant 0 : index
    %106 = vector.load %arg13[%c0_63, %c0_64, %c0_65] : memref<1x16x256xbf16, #tpu.memory_space<vmem>>, vector<1x16x256xbf16>
    %107 = vector.shape_cast %106 : vector<1x16x256xbf16> to vector<16x256xbf16>
    %108 = vector.shape_cast %105 : vector<16x256xbf16> to vector<1x16x256xbf16>
    tpu.vector_store %arg13[%c0_63, %c0_64, %c0_65], %108 {strides = array<i32>} : memref<1x16x256xbf16, #tpu.memory_space<vmem>>, vector<1x16x256xbf16>,
    return
  }
  func.func @transform_0(%arg0: i32) -> (i32, i32, i32) {
    %c0_i32 = arith.constant 0 : i32
    %c0_i32_0 = arith.constant 0 : i32
    %c0_i32_1 = arith.constant 0 : i32
    return %arg0, %c0_i32, %c0_i32_0 : i32, i32, i32
  }
  func.func @transform_1(%arg0: i32) -> (i32, i32, i32) {
    %c0_i32 = arith.constant 0 : i32
    %c0_i32_0 = arith.constant 0 : i32
    %c0_i32_1 = arith.constant 0 : i32
    %c0_i32_2 = arith.constant 0 : i32
    return %c0_i32, %c0_i32_0, %c0_i32_1 : i32, i32, i32
  }
  func.func @transform_2(%arg0: i32) -> (i32, i32) {
    %c0_i32 = arith.constant 0 : i32
    %c0_i32_0 = arith.constant 0 : i32
    %c0_i32_1 = arith.constant 0 : i32
    return %c0_i32, %c0_i32_0 : i32, i32
  }
  func.func @transform_3(%arg0: i32) -> (i32, i32) {
    %c0_i32 = arith.constant 0 : i32
    %c0_i32_0 = arith.constant 0 : i32
    %c0_i32_1 = arith.constant 0 : i32
    return %c0_i32, %c0_i32_0 : i32, i32
  }
  func.func @transform_4(%arg0: i32) -> (i32, i32) {
    %c0_i32 = arith.constant 0 : i32
    %c0_i32_0 = arith.constant 0 : i32
    %c0_i32_1 = arith.constant 0 : i32
    return %c0_i32, %c0_i32_0 : i32, i32
  }
  func.func @transform_5(%arg0: i32) -> (i32, i32) {
    %c0_i32 = arith.constant 0 : i32
    %c0_i32_0 = arith.constant 0 : i32
    %c0_i32_1 = arith.constant 0 : i32
    return %c0_i32, %c0_i32_0 : i32, i32
  }
  func.func @transform_6(%arg0: i32) -> (i32, i32) {
    %c0_i32 = arith.constant 0 : i32
    %c0_i32_0 = arith.constant 0 : i32
    %c0_i32_1 = arith.constant 0 : i32
    return %c0_i32, %c0_i32_0 : i32, i32
  }
  func.func @transform_7(%arg0: i32) -> (i32, i32) {
    %c0_i32 = arith.constant 0 : i32
    %c0_i32_0 = arith.constant 0 : i32
    %c0_i32_1 = arith.constant 0 : i32
    return %c0_i32, %c0_i32_0 : i32, i32
  }
  func.func @transform_8(%arg0: i32) -> (i32, i32) {
    %c0_i32 = arith.constant 0 : i32
    %c0_i32_0 = arith.constant 0 : i32
    %c0_i32_1 = arith.constant 0 : i32
    return %c0_i32, %c0_i32_0 : i32, i32
  }
  func.func @transform_9(%arg0: i32) -> (i32, i32) {
    %c0_i32 = arith.constant 0 : i32
    %c0_i32_0 = arith.constant 0 : i32
    %c0_i32_1 = arith.constant 0 : i32
    return %c0_i32, %c0_i32_0 : i32, i32
  }
  func.func @transform_10(%arg0: i32) -> (i32, i32) {
    %c0_i32 = arith.constant 0 : i32
    %c0_i32_0 = arith.constant 0 : i32
    %c0_i32_1 = arith.constant 0 : i32
    return %c0_i32, %c0_i32_0 : i32, i32
  }
  func.func @transform_11(%arg0: i32) -> (i32, i32) {
    %c0_i32 = arith.constant 0 : i32
    %c0_i32_0 = arith.constant 0 : i32
    %c0_i32_1 = arith.constant 0 : i32
    return %c0_i32, %c0_i32_0 : i32, i32
  }
  func.func @transform_12(%arg0: i32) -> (i32, i32, i32) {
    %c0_i32 = arith.constant 0 : i32
    %c0_i32_0 = arith.constant 0 : i32
    %c0_i32_1 = arith.constant 0 : i32
    return %arg0, %c0_i32, %c0_i32_0 : i32, i32, i32
  }
}

</mosaic_0001>

<llo_original>
// kernel: tpu_custom_call.1
$region0: #{tpu_custom_call.1}
  #allocation0 [shape = 'u32[]', space=smem, size = 0x4, offset = 0x4, fixed_abs, tag = 'smem constant byte address 0x4 - core index']
  #allocation1 [shape = 'u32[144,128]{1,0:T(1,128)}', space=vmem, size = 0x12000, scoped, tag = 'internal scratch']
  #allocation2 [shape = 'bf16[144,256]{1,0:T(16,128)(2,1)}', space=vmem, size = 0x12000, scoped, tag = 'scratch operand']
  %s0 = inlined_call_operand.vmem [shape: bf16[2,4,256], index: 0, kind: input, shape index: {}]
  %s1 = inlined_call_operand.vmem [shape: bf16[9,1,256], index: 1, kind: input, shape index: {}]
  %s2 = inlined_call_operand.vmem [shape: bf16[16,4], index: 2, kind: input, shape index: {}]
  %s3 = inlined_call_operand.vmem [shape: f32[16,1], index: 3, kind: input, shape index: {}]
  %s4 = inlined_call_operand.vmem [shape: bf16[16,48], index: 4, kind: input, shape index: {}]
  %s5 = inlined_call_operand.vmem [shape: bf16[16,48], index: 5, kind: input, shape index: {}]
  %s6 = inlined_call_operand.vmem [shape: bf16[16,48], index: 6, kind: input, shape index: {}]
  %s7 = inlined_call_operand.vmem [shape: f32[16,1], index: 7, kind: input, shape index: {}]
  %s8 = inlined_call_operand.vmem [shape: bf16[16,16], index: 8, kind: input, shape index: {}]
  %s9 = inlined_call_operand.vmem [shape: f32[16,1], index: 9, kind: input, shape index: {}]
  %s10 = inlined_call_operand.vmem [shape: bf16[16,4], index: 10, kind: input, shape index: {}]
  %s11 = inlined_call_operand.vmem [shape: f32[16,1], index: 11, kind: input, shape index: {}]
  %s12 = inlined_call_operand.hbm [shape: bf16[2,16,256], index: 12, kind: output, shape index: {}]
  %s13 = sld [smem:[#allocation0]]
  $region81: #{tpu_custom_call.1} parent=0
    _
  %s15 = ssub.s32 1, %s13
  %s16 = scalar_select 0, %s15, %s13
  $region1: #{tpu_custom_call.1} parent=0
    #allocation3 [shape = 'u8[16384]{0}', space=vmem, size = 0x4000, scoped, tag = 'output window, operand 0']
    #allocation4 [shape = 's32[2]{0}', space=sflag, size = 0x8, scoped, tag = 'scoped memory for tpu_custom_call.1']
    %17 = vsyncpa [#allocation4], 0
    %s18 = scalar_lea.sflag [#allocation4], 1
    %19 = vsyncpa %s18, 0
    loop: start=0, step=1, limit=4
    $region2: #{tpu_custom_call.1} parent=1 // loop_pre_header
      _
    $region3: #{tpu_custom_call.1} parent=1 // loop_header
      %s21 = sphi 0, %s25
      %p22 = scmp.ge.s32.totalorder %s21, 4
      %s31 = sphi 0, %s33
      %s34 = sphi 0, %s31
      %s35 = sphi 0, %s34
      %s51 = sphi 0, %s35
      %s55 = sphi 0, %s55
      %s57 = sphi 0, %s55
      %s58 = sphi 0, %s57
      %s72 = sphi 0, %s58
      %s76 = sphi 0, %s76
      %s78 = sphi 0, %s76
      %s79 = sphi 0, %s78
      %s93 = sphi 0, %s79
      %s97 = sphi 0, %s97
      %s99 = sphi 0, %s97
      %s100 = sphi 0, %s99
      %s114 = sphi 0, %s100
      %s118 = sphi 0, %s118
      %s120 = sphi 0, %s118
      %s121 = sphi 0, %s120
      %s135 = sphi 0, %s121
      %s139 = sphi 0, %s139
      %s141 = sphi 0, %s139
      %s142 = sphi 0, %s141
      %s156 = sphi 0, %s142
      %s160 = sphi 0, %s160
      %s162 = sphi 0, %s160
      %s163 = sphi 0, %s162
      %s177 = sphi 0, %s163
      %s181 = sphi 0, %s181
      %s183 = sphi 0, %s181
      %s184 = sphi 0, %s183
      %s198 = sphi 0, %s184
      %s202 = sphi 0, %s202
      %s204 = sphi 0, %s202
      %s205 = sphi 0, %s204
      %s219 = sphi 0, %s205
      %s223 = sphi 0, %s223
      %s225 = sphi 0, %s223
      %s226 = sphi 0, %s225
      %s240 = sphi 0, %s226
      %s244 = sphi 0, %s244
      %s246 = sphi 0, %s244
      %s247 = sphi 0, %s246
      %s261 = sphi 0, %s247
      %s265 = sphi 0, %s265
      %s267 = sphi 0, %s265
      %s268 = sphi 0, %s267
      %s282 = sphi 0, %s268
      %s288 = sphi 0, %s290
      %s291 = sphi 0, %s288
      %s292 = sphi 0, %s291
      %s308 = sphi 0, %s292
    $region4: #{tpu_custom_call.1} parent=1 // loop_header_branch
      %24 = sbr.rel (%p22) target = $region8
    $region5: #{tpu_custom_call.1} parent=1 // loop_body
      %s26 = ssub.s32 %s21, 1
      %s27 = ssub.s32 %s21, 2
      %s28 = sadd.s32 %s21, 1
      %s29 = ssub.s32 %s21, %s28
      %p30 = scmp.eq.s32.totalorder %s29, 0
      %s32 = sadd.s32 %s31, 1
      %s33 = scalar_select %p30, %s31, %s32
      %p36 = pneg %p30
      %p37 = scmp.eq.s32.totalorder %s21, 1
      %p38 = por %p36, %p37
      %p39 = scmp.ne.s32.totalorder %s31, %s34
      %p40 = scmp.eq.s32.totalorder %s21, 0
      %p41 = por %p39, %p40
      %p42 = scmp.ne.s32.totalorder %s31, %s34
      %p43 = scmp.eq.s32.totalorder %s26, 1
      %p44 = por %p42, %p43
      %p45 = scmp.ne.s32.totalorder %s34, %s35
      %p46 = scmp.eq.s32.totalorder %s26, 0
      %p47 = por %p45, %p46
      %p48 = scmp.ne.s32.totalorder %s34, %s35
      %p49 = scmp.eq.s32.totalorder %s27, 1
      %p50 = por %p48, %p49
      %p52 = scmp.ne.s32.totalorder %s35, %s51
      %p53 = scmp.eq.s32.totalorder %s27, 0
      %p54 = por %p52, %p53
      %s56 = sadd.s32 %s55, 1
      %p59 = scmp.eq.s32.totalorder %s21, 1
      %p60 = scmp.ne.s32.totalorder %s55, %s57
      %p61 = scmp.eq.s32.totalorder %s21, 0
      %p62 = por %p60, %p61
      %p63 = scmp.ne.s32.totalorder %s55, %s57
      %p64 = scmp.eq.s32.totalorder %s26, 1
      %p65 = por %p63, %p64
      %p66 = scmp.ne.s32.totalorder %s57, %s58
      %p67 = scmp.eq.s32.totalorder %s26, 0
      %p68 = por %p66, %p67
      %p69 = scmp.ne.s32.totalorder %s57, %s58
      %p70 = scmp.eq.s32.totalorder %s27, 1
      %p71 = por %p69, %p70
      %p73 = scmp.ne.s32.totalorder %s58, %s72
      %p74 = scmp.eq.s32.totalorder %s27, 0
      %p75 = por %p73, %p74
      %s77 = sadd.s32 %s76, 1
      %p80 = scmp.eq.s32.totalorder %s21, 1
      %p81 = scmp.ne.s32.totalorder %s76, %s78
      %p82 = scmp.eq.s32.totalorder %s21, 0
      %p83 = por %p81, %p82
      %p84 = scmp.ne.s32.totalorder %s76, %s78
      %p85 = scmp.eq.s32.totalorder %s26, 1
      %p86 = por %p84, %p85
      %p87 = scmp.ne.s32.totalorder %s78, %s79
      %p88 = scmp.eq.s32.totalorder %s26, 0
      %p89 = por %p87, %p88
      %p90 = scmp.ne.s32.totalorder %s78, %s79
      %p91 = scmp.eq.s32.totalorder %s27, 1
      %p92 = por %p90, %p91
      %p94 = scmp.ne.s32.totalorder %s79, %s93
      %p95 = scmp.eq.s32.totalorder %s27, 0
      %p96 = por %p94, %p95
      %s98 = sadd.s32 %s97, 1
      %p101 = scmp.eq.s32.totalorder %s21, 1
      %p102 = scmp.ne.s32.totalorder %s97, %s99
      %p103 = scmp.eq.s32.totalorder %s21, 0
      %p104 = por %p102, %p103
      %p105 = scmp.ne.s32.totalorder %s97, %s99
      %p106 = scmp.eq.s32.totalorder %s26, 1
      %p107 = por %p105, %p106
      %p108 = scmp.ne.s32.totalorder %s99, %s100
      %p109 = scmp.eq.s32.totalorder %s26, 0
      %p110 = por %p108, %p109
      %p111 = scmp.ne.s32.totalorder %s99, %s100
      %p112 = scmp.eq.s32.totalorder %s27, 1
      %p113 = por %p111, %p112
      %p115 = scmp.ne.s32.totalorder %s100, %s114
      %p116 = scmp.eq.s32.totalorder %s27, 0
      %p117 = por %p115, %p116
      %s119 = sadd.s32 %s118, 1
      %p122 = scmp.eq.s32.totalorder %s21, 1
      %p123 = scmp.ne.s32.totalorder %s118, %s120
      %p124 = scmp.eq.s32.totalorder %s21, 0
      %p125 = por %p123, %p124
      %p126 = scmp.ne.s32.totalorder %s118, %s120
      %p127 = scmp.eq.s32.totalorder %s26, 1
      %p128 = por %p126, %p127
      %p129 = scmp.ne.s32.totalorder %s120, %s121
      %p130 = scmp.eq.s32.totalorder %s26, 0
      %p131 = por %p129, %p130
      %p132 = scmp.ne.s32.totalorder %s120, %s121
      %p133 = scmp.eq.s32.totalorder %s27, 1
      %p134 = por %p132, %p133
      %p136 = scmp.ne.s32.totalorder %s121, %s135
      %p137 = scmp.eq.s32.totalorder %s27, 0
      %p138 = por %p136, %p137
      %s140 = sadd.s32 %s139, 1
      %p143 = scmp.eq.s32.totalorder %s21, 1
      %p144 = scmp.ne.s32.totalorder %s139, %s141
      %p145 = scmp.eq.s32.totalorder %s21, 0
      %p146 = por %p144, %p145
      %p147 = scmp.ne.s32.totalorder %s139, %s141
      %p148 = scmp.eq.s32.totalorder %s26, 1
      %p149 = por %p147, %p148
      %p150 = scmp.ne.s32.totalorder %s141, %s142
      %p151 = scmp.eq.s32.totalorder %s26, 0
      %p152 = por %p150, %p151
      %p153 = scmp.ne.s32.totalorder %s141, %s142
      %p154 = scmp.eq.s32.totalorder %s27, 1
      %p155 = por %p153, %p154
      %p157 = scmp.ne.s32.totalorder %s142, %s156
      %p158 = scmp.eq.s32.totalorder %s27, 0
      %p159 = por %p157, %p158
      %s161 = sadd.s32 %s160, 1
      %p164 = scmp.eq.s32.totalorder %s21, 1
      %p165 = scmp.ne.s32.totalorder %s160, %s162
      %p166 = scmp.eq.s32.totalorder %s21, 0
      %p167 = por %p165, %p166
      %p168 = scmp.ne.s32.totalorder %s160, %s162
      %p169 = scmp.eq.s32.totalorder %s26, 1
      %p170 = por %p168, %p169
      %p171 = scmp.ne.s32.totalorder %s162, %s163
      %p172 = scmp.eq.s32.totalorder %s26, 0
      %p173 = por %p171, %p172
      %p174 = scmp.ne.s32.totalorder %s162, %s163
      %p175 = scmp.eq.s32.totalorder %s27, 1
      %p176 = por %p174, %p175
      %p178 = scmp.ne.s32.totalorder %s163, %s177
      %p179 = scmp.eq.s32.totalorder %s27, 0
      %p180 = por %p178, %p179
      %s182 = sadd.s32 %s181, 1
      %p185 = scmp.eq.s32.totalorder %s21, 1
      %p186 = scmp.ne.s32.totalorder %s181, %s183
      %p187 = scmp.eq.s32.totalorder %s21, 0
      %p188 = por %p186, %p187
      %p189 = scmp.ne.s32.totalorder %s181, %s183
      %p190 = scmp.eq.s32.totalorder %s26, 1
      %p191 = por %p189, %p190
      %p192 = scmp.ne.s32.totalorder %s183, %s184
      %p193 = scmp.eq.s32.totalorder %s26, 0
      %p194 = por %p192, %p193
      %p195 = scmp.ne.s32.totalorder %s183, %s184
      %p196 = scmp.eq.s32.totalorder %s27, 1
      %p197 = por %p195, %p196
      %p199 = scmp.ne.s32.totalorder %s184, %s198
      %p200 = scmp.eq.s32.totalorder %s27, 0
      %p201 = por %p199, %p200
      %s203 = sadd.s32 %s202, 1
      %p206 = scmp.eq.s32.totalorder %s21, 1
      %p207 = scmp.ne.s32.totalorder %s202, %s204
      %p208 = scmp.eq.s32.totalorder %s21, 0
      %p209 = por %p207, %p208
      %p210 = scmp.ne.s32.totalorder %s202, %s204
      %p211 = scmp.eq.s32.totalorder %s26, 1
      %p212 = por %p210, %p211
      %p213 = scmp.ne.s32.totalorder %s204, %s205
      %p214 = scmp.eq.s32.totalorder %s26, 0
      %p215 = por %p213, %p214
      %p216 = scmp.ne.s32.totalorder %s204, %s205
      %p217 = scmp.eq.s32.totalorder %s27, 1
      %p218 = por %p216, %p217
      %p220 = scmp.ne.s32.totalorder %s205, %s219
      %p221 = scmp.eq.s32.totalorder %s27, 0
      %p222 = por %p220, %p221
      %s224 = sadd.s32 %s223, 1
      %p227 = scmp.eq.s32.totalorder %s21, 1
      %p228 = scmp.ne.s32.totalorder %s223, %s225
      %p229 = scmp.eq.s32.totalorder %s21, 0
      %p230 = por %p228, %p229
      %p231 = scmp.ne.s32.totalorder %s223, %s225
      %p232 = scmp.eq.s32.totalorder %s26, 1
      %p233 = por %p231, %p232
      %p234 = scmp.ne.s32.totalorder %s225, %s226
      %p235 = scmp.eq.s32.totalorder %s26, 0
      %p236 = por %p234, %p235
      %p237 = scmp.ne.s32.totalorder %s225, %s226
      %p238 = scmp.eq.s32.totalorder %s27, 1
      %p239 = por %p237, %p238
      %p241 = scmp.ne.s32.totalorder %s226, %s240
      %p242 = scmp.eq.s32.totalorder %s27, 0
      %p243 = por %p241, %p242
      %s245 = sadd.s32 %s244, 1
      %p248 = scmp.eq.s32.totalorder %s21, 1
      %p249 = scmp.ne.s32.totalorder %s244, %s246
      %p250 = scmp.eq.s32.totalorder %s21, 0
      %p251 = por %p249, %p250
      %p252 = scmp.ne.s32.totalorder %s244, %s246
      %p253 = scmp.eq.s32.totalorder %s26, 1
      %p254 = por %p252, %p253
      %p255 = scmp.ne.s32.totalorder %s246, %s247
      %p256 = scmp.eq.s32.totalorder %s26, 0
      %p257 = por %p255, %p256
      %p258 = scmp.ne.s32.totalorder %s246, %s247
      %p259 = scmp.eq.s32.totalorder %s27, 1
      %p260 = por %p258, %p259
      %p262 = scmp.ne.s32.totalorder %s247, %s261
      %p263 = scmp.eq.s32.totalorder %s27, 0
      %p264 = por %p262, %p263
      %s266 = sadd.s32 %s265, 1
      %p269 = scmp.eq.s32.totalorder %s21, 1
      %p270 = scmp.ne.s32.totalorder %s265, %s267
      %p271 = scmp.eq.s32.totalorder %s21, 0
      %p272 = por %p270, %p271
      %p273 = scmp.ne.s32.totalorder %s265, %s267
      %p274 = scmp.eq.s32.totalorder %s26, 1
      %p275 = por %p273, %p274
      %p276 = scmp.ne.s32.totalorder %s267, %s268
      %p277 = scmp.eq.s32.totalorder %s26, 0
      %p278 = por %p276, %p277
      %p279 = scmp.ne.s32.totalorder %s267, %s268
      %p280 = scmp.eq.s32.totalorder %s27, 1
      %p281 = por %p279, %p280
      %p283 = scmp.ne.s32.totalorder %s268, %s282
      %p284 = scmp.eq.s32.totalorder %s27, 0
      %p285 = por %p283, %p284
      %s286 = ssub.s32 %s21, %s28
      %p287 = scmp.eq.s32.totalorder %s286, 0
      %s289 = sadd.s32 %s288, 1
      %s290 = scalar_select %p287, %s288, %s289
      %p293 = pneg %p287
      %p294 = scmp.eq.s32.totalorder %s21, 1
      %p295 = por %p293, %p294
      %p296 = scmp.ne.s32.totalorder %s288, %s291
      %p297 = scmp.eq.s32.totalorder %s21, 0
      %p298 = por %p296, %p297
      %p299 = scmp.ne.s32.totalorder %s288, %s291
      %p300 = scmp.eq.s32.totalorder %s26, 1
      %p301 = por %p299, %p300
      %p302 = scmp.ne.s32.totalorder %s291, %s292
      %p303 = scmp.eq.s32.totalorder %s26, 0
      %p304 = por %p302, %p303
      %p305 = scmp.ne.s32.totalorder %s291, %s292
      %p306 = scmp.eq.s32.totalorder %s27, 1
      %p307 = por %p305, %p306
      %p309 = scmp.ne.s32.totalorder %s292, %s308
      %p310 = scmp.eq.s32.totalorder %s27, 0
      %p311 = por %p309, %p310
      %p312 = scmp.le.s32.totalorder 1, %s21
      %p313 = scmp.lt.s32.totalorder %s21, 3
      %p314 = pnand %p312, %p313
      %p315 = pneg %p314
      // Predicated region
      $region9: #{tpu_custom_call.1} parent=5 // pred_check
        _
      $region10: #{tpu_custom_call.1} parent=5 // pred_check_branch
        %317 = sbr.rel (%p314) target = $region12
      $region11: #{tpu_custom_call.1} parent=5 // pred_region
        %s318 = ssub.s32 %s21, 1
        // Predicated region
        $region13: #{tpu_custom_call.1} parent=11 // pred_check
          %p319 = pneg %p68
        $region14: #{tpu_custom_call.1} parent=11 // pred_check_branch
          %321 = sbr.rel (%p319) target = $region16
        $region15: #{tpu_custom_call.1} parent=11 // pred_region
          _
        $region16: #{tpu_custom_call.1} parent=11 // pred_fallthru
          _
        // Predicated region
        $region17: #{tpu_custom_call.1} parent=11 // pred_check
          %p322 = pneg %p89
        $region18: #{tpu_custom_call.1} parent=11 // pred_check_branch
          %324 = sbr.rel (%p322) target = $region20
        $region19: #{tpu_custom_call.1} parent=11 // pred_region
          _
        $region20: #{tpu_custom_call.1} parent=11 // pred_fallthru
          _
        // Predicated region
        $region21: #{tpu_custom_call.1} parent=11 // pred_check
          %p325 = pneg %p110
        $region22: #{tpu_custom_call.1} parent=11 // pred_check_branch
          %327 = sbr.rel (%p325) target = $region24
        $region23: #{tpu_custom_call.1} parent=11 // pred_region
          _
        $region24: #{tpu_custom_call.1} parent=11 // pred_fallthru
          _
        // Predicated region
        $region25: #{tpu_custom_call.1} parent=11 // pred_check
          %p328 = pneg %p131
        $region26: #{tpu_custom_call.1} parent=11 // pred_check_branch
          %330 = sbr.rel (%p328) target = $region28
        $region27: #{tpu_custom_call.1} parent=11 // pred_region
          _
        $region28: #{tpu_custom_call.1} parent=11 // pred_fallthru
          _
        // Predicated region
        $region29: #{tpu_custom_call.1} parent=11 // pred_check
          %p331 = pneg %p152
        $region30: #{tpu_custom_call.1} parent=11 // pred_check_branch
          %333 = sbr.rel (%p331) target = $region32
        $region31: #{tpu_custom_call.1} parent=11 // pred_region
          _
        $region32: #{tpu_custom_call.1} parent=11 // pred_fallthru
          _
        // Predicated region
        $region33: #{tpu_custom_call.1} parent=11 // pred_check
          %p334 = pneg %p173
        $region34: #{tpu_custom_call.1} parent=11 // pred_check_branch
          %336 = sbr.rel (%p334) target = $region36
        $region35: #{tpu_custom_call.1} parent=11 // pred_region
          _
        $region36: #{tpu_custom_call.1} parent=11 // pred_fallthru
          _
        // Predicated region
        $region37: #{tpu_custom_call.1} parent=11 // pred_check
          %p337 = pneg %p194
        $region38: #{tpu_custom_call.1} parent=11 // pred_check_branch
          %339 = sbr.rel (%p337) target = $region40
        $region39: #{tpu_custom_call.1} parent=11 // pred_region
          _
        $region40: #{tpu_custom_call.1} parent=11 // pred_fallthru
          _
        // Predicated region
        $region41: #{tpu_custom_call.1} parent=11 // pred_check
          %p340 = pneg %p215
        $region42: #{tpu_custom_call.1} parent=11 // pred_check_branch
          %342 = sbr.rel (%p340) target = $region44
        $region43: #{tpu_custom_call.1} parent=11 // pred_region
          _
        $region44: #{tpu_custom_call.1} parent=11 // pred_fallthru
          _
        // Predicated region
        $region45: #{tpu_custom_call.1} parent=11 // pred_check
          %p343 = pneg %p236
        $region46: #{tpu_custom_call.1} parent=11 // pred_check_branch
          %345 = sbr.rel (%p343) target = $region48
        $region47: #{tpu_custom_call.1} parent=11 // pred_region
          _
        $region48: #{tpu_custom_call.1} parent=11 // pred_fallthru
          _
        // Predicated region
        $region49: #{tpu_custom_call.1} parent=11 // pred_check
          %p346 = pneg %p257
        $region50: #{tpu_custom_call.1} parent=11 // pred_check_branch
          %348 = sbr.rel (%p346) target = $region52
        $region51: #{tpu_custom_call.1} parent=11 // pred_region
          _
        $region52: #{tpu_custom_call.1} parent=11 // pred_fallthru
          _
        // Predicated region
        $region53: #{tpu_custom_call.1} parent=11 // pred_check
          %p349 = pneg %p278
        $region54: #{tpu_custom_call.1} parent=11 // pred_check_branch
          %351 = sbr.rel (%p349) target = $region56
        $region55: #{tpu_custom_call.1} parent=11 // pred_region
          _
        $region56: #{tpu_custom_call.1} parent=11 // pred_fallthru
          _
      $region12: #{tpu_custom_call.1} parent=5 // pred_fallthru
        _
      %p352 = scmp.lt.s32.totalorder %s21, 2
      // Predicated region
      $region57: #{tpu_custom_call.1} parent=5 // pred_check
        %p353 = pneg %p352
      $region58: #{tpu_custom_call.1} parent=5 // pred_check_branch
        %355 = sbr.rel (%p353) target = $region60
      $region59: #{tpu_custom_call.1} parent=5 // pred_region
        // Predicated region
        $region61: #{tpu_custom_call.1} parent=59 // pred_check
          %p356 = pneg %p41
        $region62: #{tpu_custom_call.1} parent=59 // pred_check_branch
          %358 = sbr.rel (%p356) target = $region64
        $region63: #{tpu_custom_call.1} parent=59 // pred_region
          %p359 = scmp.lt.s32.totalorder %s21, 1
          %s360 = scalar_select %p359, %s21, 1
          %s361 = smul.addr %s360, 2
          %s362 = smul.addr %s361, 2
          %s363 = scalar_lea.vmem %s0, %s362
        $region64: #{tpu_custom_call.1} parent=59 // pred_fallthru
          _
      $region60: #{tpu_custom_call.1} parent=5 // pred_fallthru
        _
      %p364 = scmp.le.s32.totalorder 1, %s21
      %p365 = scmp.lt.s32.totalorder %s21, 3
      %p366 = pnand %p364, %p365
      %p367 = pneg %p366
      // Predicated region
      $region65: #{tpu_custom_call.1} parent=5 // pred_check
        _
      $region66: #{tpu_custom_call.1} parent=5 // pred_check_branch
        %369 = sbr.rel (%p366) target = $region68
      $region67: #{tpu_custom_call.1} parent=5 // pred_region
        %s370 = ssub.s32 %s21, 1
        %p371 = scmp.lt.s32.totalorder %s26, 1
        %s372 = scalar_select %p371, %s26, 1
        %s373 = smul.addr %s372, 2
        %s374 = smul.addr %s373, 2
        %s375 = scalar_lea.vmem %s0, %s374
        %p376 = pneg %p47
        %p377 = pneg %p44
        %p378 = pneg %p68
        %p379 = pneg %p65
        %p380 = pneg %p89
        %p381 = pneg %p86
        %p382 = pneg %p110
        %p383 = pneg %p107
        %p384 = pneg %p131
        %p385 = pneg %p128
        %p386 = pneg %p152
        %p387 = pneg %p149
        %p388 = pneg %p173
        %p389 = pneg %p170
        %p390 = pneg %p194
        %p391 = pneg %p191
        %p392 = pneg %p215
        %p393 = pneg %p212
        %p394 = pneg %p236
        %p395 = pneg %p233
        %p396 = pneg %p257
        %p397 = pneg %p254
        %p398 = pneg %p278
        %p399 = pneg %p275
        %p400 = pneg %p304
        %p401 = pneg %p301
        %s402 = sand.u32 %s291, 1
        %s403 = scalar_lea.sflag [#allocation4], %s402
        %s404 = sand.u32 %s291, 1
        %s405 = smul.addr %s404, 16
        %s406 = scalar_lea.vmem [#allocation3], %s405
        %p407 = scmp.lt.s32.totalorder %s26, 1
        %s408 = scalar_select %p407, %s26, 1
        %s409 = smul.addr %s408, 2
        %s410 = smul.addr %s409, 2
        %s411 = scalar_lea.vmem %s0, %s410
        %v413 = vld [vmem:[%s411] sm:$0xf]
        %v414 = vld [vmem:[%s2] sm:$0xf]
        %v415 = vld [vmem:[%s2 + $0x4] sm:$0xf]
        %v416 = vld [vmem:[%s3] sm:$0xff]
        %v417 = vld [vmem:[%s3 + $0x8] sm:$0xff]
        %419 = vset.pattern.permute.xlu0 0
        %420 = vperm.xlu0 %419, %v416
        %v421 = vpop.permute.xlu0 %420
        %424 = vset.pattern.permute.xlu0 0
        %425 = vperm.xlu0 %424, %v417
        %v426 = vpop.permute.xlu0 %425
        %v430 = vunpack.c.l.b16 %v414
        %v431 = vunpack.c.l.b16 %v415
        %v432 = vpack.c.b16 %v431, %v430
        %v435 = vunpack.c.l.s4 1983009808
        %v436 = vunpack.c.0.s8 %v435
        %v437 = vlaneseq
        %v438 = vshrl.u32 %v437, 7
        %v439 = vsub.s32 %v436, %v438
        %v440 = vrot.slane %v413, %v439
        %v441 = vcombine.high %v440, %v440
        %vm442 = vcmask 31744
        %v444 = vsel %vm442, %v432, 0
        %vm446 = vcmask 1041408
        %v448 = vsel %vm446, %v440, 0
        %v451 = vsel %vm446, %v441, 0
        %453 = vmatprep.subr.bf16.mxu0 %v451
        %454 = vmatpush1.bf16.msra.mxu0 %v448
        %455 = vmatprep.subr.bf16.mxu0 0
        %456 = vmatpush1.bf16.msra.mxu0 0
        %457 = vmatprep.subr.bf16.mxu0 0
        %458 = vmatpush1.bf16.msra.mxu0 0
        %459 = vmatprep.subr.bf16.mxu0 0
        %460 = vmatpush1.bf16.msra.mxu0 0
        %461 = vmatprep.subr.bf16.mxu0 0
        %462 = vmatpush1.bf16.msra.mxu0 0
        %463 = vmatprep.subr.bf16.mxu0 0
        %464 = vmatpush1.bf16.msra.mxu0 0
        %465 = vmatprep.subr.bf16.mxu0 0
        %466 = vmatpush1.bf16.msra.mxu0 0
        %467 = vmatprep.subr.bf16.mxu0 0
        %468 = vmatpush1.bf16.msra.mxu0 0
        %469 = vmatprep.subr.bf16.mxu0 0
        %470 = vmatpush1.bf16.msra.mxu0 0
        %471 = vmatprep.subr.bf16.mxu0 0
        %472 = vmatpush1.bf16.msra.mxu0 0
        %473 = vmatprep.subr.bf16.mxu0 0
        %474 = vmatpush1.bf16.msra.mxu0 0
        %475 = vmatprep.subr.bf16.mxu0 0
        %476 = vmatpush1.bf16.msra.mxu0 0
        %477 = vmatprep.subr.bf16.mxu0 0
        %478 = vmatpush1.bf16.msra.mxu0 0
        %479 = vmatprep.subr.bf16.mxu0 0
        %480 = vmatpush1.bf16.msra.mxu0 0
        %481 = vmatprep.subr.bf16.mxu0 0
        %482 = vmatpush1.bf16.msra.mxu0 0
        %483 = vmatprep.subr.bf16.mxu0 0
        %484 = vmatpush1.bf16.msra.mxu0 0
        %485 = vmatprep.mubr.bf16.mxu0 0
        %486 = vmatmul.mubr.bf16.gmra.mrb[0].mxu0 %v444
        %v487 = vpop.f32.mrb[0].mxu0
        %v488 = vadd.f32 %v421, %v487
        %v489 = vpop.f32.mrb[0].mxu0
        %v490 = vadd.f32 %v421, %v489
        %v491 = vpop.f32.mrb[0].mxu0
        %v492 = vadd.f32 %v426, %v491
        %v493 = vpop.f32.mrb[0].mxu0
        %v494 = vadd.f32 %v426, %v493
        %495 = vdwg.mxu0
        %v496 = vmax.f32 %v488, 0.0
        %v497 = vmax.f32 %v490, 0.0
        %v498 = vmax.f32 %v492, 0.0
        %v499 = vmax.f32 %v494, 0.0
        %v500 = vpack.c.bf16 %v498, %v496
        %v501 = vpack.c.bf16 %v499, %v497
        %503 = vrot.lane.b32.xlu0 %v501, 34
        %v504 = vpop.permute.xlu0 %503
        %506 = vrot.lane.b32.xlu0 %v500, 34
        %v507 = vpop.permute.xlu0 %506
        %vm508 = vcmask 277504
        %v509 = vsel %vm508, %v507, %v504
        %vm511 = vcmask 277504
        %v514 = vsel %vm511, %v504, %v507
        %v516 = vld [vmem:[%s1] sm:$0x3]
        %v519 = vunpack.c.l.s4 1966171168
        %v520 = vunpack.c.0.s8 %v519
        %v521 = vlaneseq
        %v522 = vshrl.u32 %v521, 7
        %v523 = vsub.s32 %v520, %v522
        %v524 = vrot.slane %v516, %v523
        %v525 = vcombine.high %v524, %v524
        %v527 = vunpack.c.l.s4 1966171168
        %v528 = vunpack.c.0.s8 %v527
        %v529 = vlaneseq
        %v530 = vshrl.u32 %v529, 7
        %v531 = vsub.s32 %v528, %v530
        %v532 = vrot.slane %v524, %v531
        %v534 = vunpack.c.l.s4 1966171168
        %v535 = vunpack.c.0.s8 %v534
        %v536 = vlaneseq
        %v537 = vshrl.u32 %v536, 7
        %v538 = vsub.s32 %v535, %v537
        %v539 = vrot.slane %v525, %v538
        %v541 = vpack.i.b16 %v532, %v532
        %v543 = vlaneseq
        %v544 = vshrl.u32 %v543, 7
        %v545 = vsub.s32 0, %v544
        %v546 = vrot.slane %v541, %v545
        %v548 = vpack.i.b16 %v539, %v539
        %v550 = vlaneseq
        %v551 = vshrl.u32 %v550, 7
        %v552 = vsub.s32 0, %v551
        %v553 = vrot.slane %v548, %v552
        %v554 = vmul.bf16 %v514, %v546
        %v555 = vmul.bf16 %v509, %v553
        %556 = vst [vmem:[#allocation2] sm:$0xff] %v554
        %557 = vst [vmem:[#allocation2 + $0x8] sm:$0xff] %v555
        %558 = vrot.lane.b32.xlu0 %v501, 32
        %v559 = vpop.permute.xlu0 %558
        %560 = vrot.lane.b32.xlu0 %v500, 32
        %v561 = vpop.permute.xlu0 %560
        %vm562 = vcmask 261120
        %v563 = vsel %vm562, %v561, %v559
        %vm565 = vcmask 261120
        %v568 = vsel %vm565, %v559, %v561
        %s570 = scalar_lea.vmem %s1, 2
        %v571 = vld [vmem:[%s570] sm:$0x3]
        %v574 = vunpack.c.l.s4 1966171168
        %v575 = vunpack.c.0.s8 %v574
        %v576 = vlaneseq
        %v577 = vshrl.u32 %v576, 7
        %v578 = vsub.s32 %v575, %v577
        %v579 = vrot.slane %v571, %v578
        %v580 = vcombine.high %v579, %v579
        %v582 = vunpack.c.l.s4 1966171168
        %v583 = vunpack.c.0.s8 %v582
        %v584 = vlaneseq
        %v585 = vshrl.u32 %v584, 7
        %v586 = vsub.s32 %v583, %v585
        %v587 = vrot.slane %v579, %v586
        %v589 = vunpack.c.l.s4 1966171168
        %v590 = vunpack.c.0.s8 %v589
        %v591 = vlaneseq
        %v592 = vshrl.u32 %v591, 7
        %v593 = vsub.s32 %v590, %v592
        %v594 = vrot.slane %v580, %v593
        %v596 = vpack.i.b16 %v587, %v587
        %v598 = vlaneseq
        %v599 = vshrl.u32 %v598, 7
        %v600 = vsub.s32 0, %v599
        %v601 = vrot.slane %v596, %v600
        %v603 = vpack.i.b16 %v594, %v594
        %v605 = vlaneseq
        %v606 = vshrl.u32 %v605, 7
        %v607 = vsub.s32 0, %v606
        %v608 = vrot.slane %v603, %v607
        %v609 = vmul.bf16 %v568, %v601
        %v610 = vmul.bf16 %v563, %v608
        %611 = vst [vmem:[#allocation2 + $0x10] sm:$0xff] %v609
        %612 = vst [vmem:[#allocation2 + $0x18] sm:$0xff] %v610
        %613 = vrot.lane.b32.xlu0 %v501, 30
        %v614 = vpop.permute.xlu0 %613
        %615 = vrot.lane.b32.xlu0 %v500, 30
        %v616 = vpop.permute.xlu0 %615
        %vm617 = vcmask 244736
        %v618 = vsel %vm617, %v616, %v614
        %vm620 = vcmask 244736
        %v623 = vsel %vm620, %v614, %v616
        %s625 = scalar_lea.vmem %s1, 4
        %v626 = vld [vmem:[%s625] sm:$0x3]
        %v629 = vunpack.c.l.s4 1966171168
        %v630 = vunpack.c.0.s8 %v629
        %v631 = vlaneseq
        %v632 = vshrl.u32 %v631, 7
        %v633 = vsub.s32 %v630, %v632
        %v634 = vrot.slane %v626, %v633
        %v635 = vcombine.high %v634, %v634
        %v637 = vunpack.c.l.s4 1966171168
        %v638 = vunpack.c.0.s8 %v637
        %v639 = vlaneseq
        %v640 = vshrl.u32 %v639, 7
        %v641 = vsub.s32 %v638, %v640
        %v642 = vrot.slane %v634, %v641
        %v644 = vunpack.c.l.s4 1966171168
        %v645 = vunpack.c.0.s8 %v644
        %v646 = vlaneseq
        %v647 = vshrl.u32 %v646, 7
        %v648 = vsub.s32 %v645, %v647
        %v649 = vrot.slane %v635, %v648
        %v651 = vpack.i.b16 %v642, %v642
        %v653 = vlaneseq
        %v654 = vshrl.u32 %v653, 7
        %v655 = vsub.s32 0, %v654
        %v656 = vrot.slane %v651, %v655
        %v658 = vpack.i.b16 %v649, %v649
        %v660 = vlaneseq
        %v661 = vshrl.u32 %v660, 7
        %v662 = vsub.s32 0, %v661
        %v663 = vrot.slane %v658, %v662
        %v664 = vmul.bf16 %v623, %v656
        %v665 = vmul.bf16 %v618, %v663
        %666 = vst [vmem:[#allocation2 + $0x20] sm:$0xff] %v664
        %667 = vst [vmem:[#allocation2 + $0x28] sm:$0xff] %v665
        %v668 = vld [vmem:[%s4] sm:$0xf]
        %v669 = vld [vmem:[%s4 + $0x4] sm:$0xf]
        %v670 = vld [vmem:[#allocation2] sm:$0xff]
        %v671 = vld [vmem:[#allocation2 + $0x8] sm:$0xff]
        %v672 = vld [vmem:[#allocation2 + $0x10] sm:$0xff]
        %v673 = vld [vmem:[#allocation2 + $0x18] sm:$0xff]
        %v674 = vld [vmem:[#allocation2 + $0x20] sm:$0xff]
        %v675 = vld [vmem:[#allocation2 + $0x28] sm:$0xff]
        %676 = vrot.lane.b32.xlu0 %v501, 2
        %v677 = vpop.permute.xlu0 %676
        %678 = vrot.lane.b32.xlu0 %v500, 2
        %v679 = vpop.permute.xlu0 %678
        %vm680 = vcmask 15360
        %v681 = vsel %vm680, %v679, %v677
        %vm683 = vcmask 15360
        %v686 = vsel %vm683, %v677, %v679
        %s688 = scalar_lea.vmem %s1, 6
        %v689 = vld [vmem:[%s688] sm:$0x3]
        %v692 = vunpack.c.l.s4 1966171168
        %v693 = vunpack.c.0.s8 %v692
        %v694 = vlaneseq
        %v695 = vshrl.u32 %v694, 7
        %v696 = vsub.s32 %v693, %v695
        %v697 = vrot.slane %v689, %v696
        %v698 = vcombine.high %v697, %v697
        %v700 = vunpack.c.l.s4 1966171168
        %v701 = vunpack.c.0.s8 %v700
        %v702 = vlaneseq
        %v703 = vshrl.u32 %v702, 7
        %v704 = vsub.s32 %v701, %v703
        %v705 = vrot.slane %v697, %v704
        %v707 = vunpack.c.l.s4 1966171168
        %v708 = vunpack.c.0.s8 %v707
        %v709 = vlaneseq
        %v710 = vshrl.u32 %v709, 7
        %v711 = vsub.s32 %v708, %v710
        %v712 = vrot.slane %v698, %v711
        %v714 = vpack.i.b16 %v705, %v705
        %v716 = vlaneseq
        %v717 = vshrl.u32 %v716, 7
        %v718 = vsub.s32 0, %v717
        %v719 = vrot.slane %v714, %v718
        %v721 = vpack.i.b16 %v712, %v712
        %v723 = vlaneseq
        %v724 = vshrl.u32 %v723, 7
        %v725 = vsub.s32 0, %v724
        %v726 = vrot.slane %v721, %v725
        %v727 = vmul.bf16 %v686, %v719
        %v728 = vmul.bf16 %v681, %v726
        %729 = vst [vmem:[#allocation2 + $0x30] sm:$0xff] %v727
        %730 = vst [vmem:[#allocation2 + $0x38] sm:$0xff] %v728
        %731 = vst [vmem:[#allocation2 + $0x40] sm:$0xff] %v500
        %732 = vst [vmem:[#allocation2 + $0x48] sm:$0xff] %v501
        %733 = vrot.lane.b32.xlu0 %v500, 126
        %v734 = vpop.permute.xlu0 %733
        %735 = vrot.lane.b32.xlu0 %v501, 126
        %v736 = vpop.permute.xlu0 %735
        %vm737 = vcmask 1031168
        %v738 = vsel %vm737, %v734, %v736
        %vm740 = vcmask 1031168
        %v743 = vsel %vm740, %v736, %v734
        %s745 = scalar_lea.vmem %s1, 10
        %v746 = vld [vmem:[%s745] sm:$0x3]
        %v749 = vunpack.c.l.s4 1966171168
        %v750 = vunpack.c.0.s8 %v749
        %v751 = vlaneseq
        %v752 = vshrl.u32 %v751, 7
        %v753 = vsub.s32 %v750, %v752
        %v754 = vrot.slane %v746, %v753
        %v755 = vcombine.high %v754, %v754
        %v757 = vunpack.c.l.s4 1966171168
        %v758 = vunpack.c.0.s8 %v757
        %v759 = vlaneseq
        %v760 = vshrl.u32 %v759, 7
        %v761 = vsub.s32 %v758, %v760
        %v762 = vrot.slane %v754, %v761
        %v764 = vunpack.c.l.s4 1966171168
        %v765 = vunpack.c.0.s8 %v764
        %v766 = vlaneseq
        %v767 = vshrl.u32 %v766, 7
        %v768 = vsub.s32 %v765, %v767
        %v769 = vrot.slane %v755, %v768
        %v771 = vpack.i.b16 %v762, %v762
        %v773 = vlaneseq
        %v774 = vshrl.u32 %v773, 7
        %v775 = vsub.s32 0, %v774
        %v776 = vrot.slane %v771, %v775
        %v778 = vpack.i.b16 %v769, %v769
        %v780 = vlaneseq
        %v781 = vshrl.u32 %v780, 7
        %v782 = vsub.s32 0, %v781
        %v783 = vrot.slane %v778, %v782
        %v784 = vmul.bf16 %v738, %v776
        %v785 = vmul.bf16 %v743, %v783
        %786 = vst [vmem:[#allocation2 + $0x50] sm:$0xff] %v784
        %787 = vst [vmem:[#allocation2 + $0x58] sm:$0xff] %v785
        %v788 = vld [vmem:[%s5] sm:$0xf]
        %v789 = vld [vmem:[%s5 + $0x4] sm:$0xf]
        %v790 = vld [vmem:[#allocation2 + $0x30] sm:$0xff]
        %v791 = vld [vmem:[#allocation2 + $0x38] sm:$0xff]
        %v792 = vld [vmem:[#allocation2 + $0x40] sm:$0xff]
        %v793 = vld [vmem:[#allocation2 + $0x48] sm:$0xff]
        %v794 = vld [vmem:[#allocation2 + $0x50] sm:$0xff]
        %v795 = vld [vmem:[#allocation2 + $0x58] sm:$0xff]
        %v798 = vunpack.c.l.b16 %v788
        %v799 = vunpack.c.l.b16 %v789
        %v800 = vpack.c.b16 %v799, %v798
        %vm801 = vcmask 392192
        %v803 = vsel %vm801, %v800, 0
        %805 = vmatprep.subr.bf16.mxu0 %v791
        %806 = vmatpush1.bf16.msra.mxu0 %v790
        %807 = vmatprep.subr.bf16.mxu0 %v793
        %808 = vmatpush1.bf16.msra.mxu0 %v792
        %809 = vmatprep.subr.bf16.mxu0 %v795
        %810 = vmatpush1.bf16.msra.mxu0 %v794
        %811 = vmatprep.subr.bf16.mxu0 0
        %812 = vmatpush1.bf16.msra.mxu0 0
        %813 = vmatprep.subr.bf16.mxu0 0
        %814 = vmatpush1.bf16.msra.mxu0 0
        %815 = vmatprep.subr.bf16.mxu0 0
        %816 = vmatpush1.bf16.msra.mxu0 0
        %817 = vmatprep.subr.bf16.mxu0 0
        %818 = vmatpush1.bf16.msra.mxu0 0
        %819 = vmatprep.subr.bf16.mxu0 0
        %820 = vmatpush1.bf16.msra.mxu0 0
        %821 = vmatprep.subr.bf16.mxu0 0
        %822 = vmatpush1.bf16.msra.mxu0 0
        %823 = vmatprep.subr.bf16.mxu0 0
        %824 = vmatpush1.bf16.msra.mxu0 0
        %825 = vmatprep.subr.bf16.mxu0 0
        %826 = vmatpush1.bf16.msra.mxu0 0
        %827 = vmatprep.subr.bf16.mxu0 0
        %828 = vmatpush1.bf16.msra.mxu0 0
        %829 = vmatprep.subr.bf16.mxu0 0
        %830 = vmatpush1.bf16.msra.mxu0 0
        %831 = vmatprep.subr.bf16.mxu0 0
        %832 = vmatpush1.bf16.msra.mxu0 0
        %833 = vmatprep.subr.bf16.mxu0 0
        %834 = vmatpush1.bf16.msra.mxu0 0
        %835 = vmatprep.subr.bf16.mxu0 0
        %836 = vmatpush1.bf16.msra.mxu0 0
        %837 = vmatprep.mubr.bf16.mxu0 0
        %838 = vmatmul.mubr.bf16.gmra.mrb[0].mxu0 %v803
        %v839 = vpop.f32.mrb[0].mxu0
        %v840 = vadd.f32 0.0, %v839
        %v841 = vpop.f32.mrb[0].mxu0
        %v842 = vadd.f32 0.0, %v841
        %v843 = vpop.f32.mrb[0].mxu0
        %v844 = vadd.f32 0.0, %v843
        %v845 = vpop.f32.mrb[0].mxu0
        %v846 = vadd.f32 0.0, %v845
        %847 = vdwg.mxu0
        %v850 = vunpack.c.l.b16 %v668
        %v851 = vunpack.c.l.b16 %v669
        %v852 = vpack.c.b16 %v851, %v850
        %v854 = vsel %vm801, %v852, 0
        %856 = vmatprep.subr.bf16.mxu0 %v671
        %857 = vmatpush1.bf16.msra.mxu0 %v670
        %858 = vmatprep.subr.bf16.mxu0 %v673
        %859 = vmatpush1.bf16.msra.mxu0 %v672
        %860 = vmatprep.subr.bf16.mxu0 %v675
        %861 = vmatpush1.bf16.msra.mxu0 %v674
        %862 = vmatprep.subr.bf16.mxu0 0
        %863 = vmatpush1.bf16.msra.mxu0 0
        %864 = vmatprep.subr.bf16.mxu0 0
        %865 = vmatpush1.bf16.msra.mxu0 0
        %866 = vmatprep.subr.bf16.mxu0 0
        %867 = vmatpush1.bf16.msra.mxu0 0
        %868 = vmatprep.subr.bf16.mxu0 0
        %869 = vmatpush1.bf16.msra.mxu0 0
        %870 = vmatprep.subr.bf16.mxu0 0
        %871 = vmatpush1.bf16.msra.mxu0 0
        %872 = vmatprep.subr.bf16.mxu0 0
        %873 = vmatpush1.bf16.msra.mxu0 0
        %874 = vmatprep.subr.bf16.mxu0 0
        %875 = vmatpush1.bf16.msra.mxu0 0
        %876 = vmatprep.subr.bf16.mxu0 0
        %877 = vmatpush1.bf16.msra.mxu0 0
        %878 = vmatprep.subr.bf16.mxu0 0
        %879 = vmatpush1.bf16.msra.mxu0 0
        %880 = vmatprep.subr.bf16.mxu0 0
        %881 = vmatpush1.bf16.msra.mxu0 0
        %882 = vmatprep.subr.bf16.mxu0 0
        %883 = vmatpush1.bf16.msra.mxu0 0
        %884 = vmatprep.subr.bf16.mxu0 0
        %885 = vmatpush1.bf16.msra.mxu0 0
        %886 = vmatprep.subr.bf16.mxu0 0
        %887 = vmatpush1.bf16.msra.mxu0 0
        %888 = vmatprep.mubr.bf16.mxu0 0
        %889 = vmatmul.mubr.bf16.gmra.mrb[0].mxu0 %v854
        %v890 = vpop.f32.mrb[0].mxu0
        %v891 = vadd.f32 %v840, %v890
        %v892 = vpop.f32.mrb[0].mxu0
        %v893 = vadd.f32 %v842, %v892
        %v894 = vpop.f32.mrb[0].mxu0
        %v895 = vadd.f32 %v844, %v894
        %v896 = vpop.f32.mrb[0].mxu0
        %v897 = vadd.f32 %v846, %v896
        %898 = vdwg.mxu0
        %899 = vrot.lane.b32.xlu0 %v500, 98
        %v900 = vpop.permute.xlu0 %899
        %901 = vrot.lane.b32.xlu0 %v501, 98
        %v902 = vpop.permute.xlu0 %901
        %vm903 = vcmask 801792
        %v904 = vsel %vm903, %v900, %v902
        %vm906 = vcmask 801792
        %v909 = vsel %vm906, %v902, %v900
        %s911 = scalar_lea.vmem %s1, 12
        %v912 = vld [vmem:[%s911] sm:$0x3]
        %v915 = vunpack.c.l.s4 1966171168
        %v916 = vunpack.c.0.s8 %v915
        %v917 = vlaneseq
        %v918 = vshrl.u32 %v917, 7
        %v919 = vsub.s32 %v916, %v918
        %v920 = vrot.slane %v912, %v919
        %v921 = vcombine.high %v920, %v920
        %v923 = vunpack.c.l.s4 1966171168
        %v924 = vunpack.c.0.s8 %v923
        %v925 = vlaneseq
        %v926 = vshrl.u32 %v925, 7
        %v927 = vsub.s32 %v924, %v926
        %v928 = vrot.slane %v920, %v927
        %v930 = vunpack.c.l.s4 1966171168
        %v931 = vunpack.c.0.s8 %v930
        %v932 = vlaneseq
        %v933 = vshrl.u32 %v932, 7
        %v934 = vsub.s32 %v931, %v933
        %v935 = vrot.slane %v921, %v934
        %v937 = vpack.i.b16 %v928, %v928
        %v939 = vlaneseq
        %v940 = vshrl.u32 %v939, 7
        %v941 = vsub.s32 0, %v940
        %v942 = vrot.slane %v937, %v941
        %v944 = vpack.i.b16 %v935, %v935
        %v946 = vlaneseq
        %v947 = vshrl.u32 %v946, 7
        %v948 = vsub.s32 0, %v947
        %v949 = vrot.slane %v944, %v948
        %v950 = vmul.bf16 %v904, %v942
        %v951 = vmul.bf16 %v909, %v949
        %952 = vst [vmem:[#allocation2 + $0x60] sm:$0xff] %v950
        %953 = vst [vmem:[#allocation2 + $0x68] sm:$0xff] %v951
        %954 = vrot.lane.b32.xlu0 %v500, 96
        %v955 = vpop.permute.xlu0 %954
        %956 = vrot.lane.b32.xlu0 %v501, 96
        %v957 = vpop.permute.xlu0 %956
        %vm958 = vcmask 785408
        %v959 = vsel %vm958, %v955, %v957
        %vm961 = vcmask 785408
        %v964 = vsel %vm961, %v957, %v955
        %s966 = scalar_lea.vmem %s1, 14
        %v967 = vld [vmem:[%s966] sm:$0x3]
        %v970 = vunpack.c.l.s4 1966171168
        %v971 = vunpack.c.0.s8 %v970
        %v972 = vlaneseq
        %v973 = vshrl.u32 %v972, 7
        %v974 = vsub.s32 %v971, %v973
        %v975 = vrot.slane %v967, %v974
        %v976 = vcombine.high %v975, %v975
        %v978 = vunpack.c.l.s4 1966171168
        %v979 = vunpack.c.0.s8 %v978
        %v980 = vlaneseq
        %v981 = vshrl.u32 %v980, 7
        %v982 = vsub.s32 %v979, %v981
        %v983 = vrot.slane %v975, %v982
        %v985 = vunpack.c.l.s4 1966171168
        %v986 = vunpack.c.0.s8 %v985
        %v987 = vlaneseq
        %v988 = vshrl.u32 %v987, 7
        %v989 = vsub.s32 %v986, %v988
        %v990 = vrot.slane %v976, %v989
        %v992 = vpack.i.b16 %v983, %v983
        %v994 = vlaneseq
        %v995 = vshrl.u32 %v994, 7
        %v996 = vsub.s32 0, %v995
        %v997 = vrot.slane %v992, %v996
        %v999 = vpack.i.b16 %v990, %v990
        %v1001 = vlaneseq
        %v1002 = vshrl.u32 %v1001, 7
        %v1003 = vsub.s32 0, %v1002
        %v1004 = vrot.slane %v999, %v1003
        %v1005 = vmul.bf16 %v959, %v997
        %v1006 = vmul.bf16 %v964, %v1004
        %1007 = vst [vmem:[#allocation2 + $0x70] sm:$0xff] %v1005
        %1008 = vst [vmem:[#allocation2 + $0x78] sm:$0xff] %v1006
        %1009 = vrot.lane.b32.xlu0 %v500, 94
        %v1010 = vpop.permute.xlu0 %1009
        %1011 = vrot.lane.b32.xlu0 %v501, 94
        %v1012 = vpop.permute.xlu0 %1011
        %vm1013 = vcmask 769024
        %v1014 = vsel %vm1013, %v1010, %v1012
        %vm1016 = vcmask 769024
        %v1019 = vsel %vm1016, %v1012, %v1010
        %s1021 = scalar_lea.vmem %s1, 16
        %v1022 = vld [vmem:[%s1021] sm:$0x3]
        %v1025 = vunpack.c.l.s4 1966171168
        %v1026 = vunpack.c.0.s8 %v1025
        %v1027 = vlaneseq
        %v1028 = vshrl.u32 %v1027, 7
        %v1029 = vsub.s32 %v1026, %v1028
        %v1030 = vrot.slane %v1022, %v1029
        %v1031 = vcombine.high %v1030, %v1030
        %v1033 = vunpack.c.l.s4 1966171168
        %v1034 = vunpack.c.0.s8 %v1033
        %v1035 = vlaneseq
        %v1036 = vshrl.u32 %v1035, 7
        %v1037 = vsub.s32 %v1034, %v1036
        %v1038 = vrot.slane %v1030, %v1037
        %v1040 = vunpack.c.l.s4 1966171168
        %v1041 = vunpack.c.0.s8 %v1040
        %v1042 = vlaneseq
        %v1043 = vshrl.u32 %v1042, 7
        %v1044 = vsub.s32 %v1041, %v1043
        %v1045 = vrot.slane %v1031, %v1044
        %v1047 = vpack.i.b16 %v1038, %v1038
        %v1049 = vlaneseq
        %v1050 = vshrl.u32 %v1049, 7
        %v1051 = vsub.s32 0, %v1050
        %v1052 = vrot.slane %v1047, %v1051
        %v1054 = vpack.i.b16 %v1045, %v1045
        %v1056 = vlaneseq
        %v1057 = vshrl.u32 %v1056, 7
        %v1058 = vsub.s32 0, %v1057
        %v1059 = vrot.slane %v1054, %v1058
        %v1060 = vmul.bf16 %v1014, %v1052
        %v1061 = vmul.bf16 %v1019, %v1059
        %1062 = vst [vmem:[#allocation2 + $0x80] sm:$0xff] %v1060
        %1063 = vst [vmem:[#allocation2 + $0x88] sm:$0xff] %v1061
        %v1064 = vld [vmem:[%s6] sm:$0xf]
        %v1065 = vld [vmem:[%s6 + $0x4] sm:$0xf]
        %v1066 = vld [vmem:[#allocation2 + $0x60] sm:$0xff]
        %v1067 = vld [vmem:[#allocation2 + $0x68] sm:$0xff]
        %v1068 = vld [vmem:[#allocation2 + $0x70] sm:$0xff]
        %v1069 = vld [vmem:[#allocation2 + $0x78] sm:$0xff]
        %v1070 = vld [vmem:[#allocation2 + $0x80] sm:$0xff]
        %v1071 = vld [vmem:[#allocation2 + $0x88] sm:$0xff]
        %v1074 = vunpack.c.l.b16 %v1064
        %v1075 = vunpack.c.l.b16 %v1065
        %v1076 = vpack.c.b16 %v1075, %v1074
        %v1078 = vsel %vm801, %v1076, 0
        %1080 = vmatprep.subr.bf16.mxu0 %v1067
        %1081 = vmatpush1.bf16.msra.mxu0 %v1066
        %1082 = vmatprep.subr.bf16.mxu0 %v1069
        %1083 = vmatpush1.bf16.msra.mxu0 %v1068
        %1084 = vmatprep.subr.bf16.mxu0 %v1071
        %1085 = vmatpush1.bf16.msra.mxu0 %v1070
        %1086 = vmatprep.subr.bf16.mxu0 0
        %1087 = vmatpush1.bf16.msra.mxu0 0
        %1088 = vmatprep.subr.bf16.mxu0 0
        %1089 = vmatpush1.bf16.msra.mxu0 0
        %1090 = vmatprep.subr.bf16.mxu0 0
        %1091 = vmatpush1.bf16.msra.mxu0 0
        %1092 = vmatprep.subr.bf16.mxu0 0
        %1093 = vmatpush1.bf16.msra.mxu0 0
        %1094 = vmatprep.subr.bf16.mxu0 0
        %1095 = vmatpush1.bf16.msra.mxu0 0
        %1096 = vmatprep.subr.bf16.mxu0 0
        %1097 = vmatpush1.bf16.msra.mxu0 0
        %1098 = vmatprep.subr.bf16.mxu0 0
        %1099 = vmatpush1.bf16.msra.mxu0 0
        %1100 = vmatprep.subr.bf16.mxu0 0
        %1101 = vmatpush1.bf16.msra.mxu0 0
        %1102 = vmatprep.subr.bf16.mxu0 0
        %1103 = vmatpush1.bf16.msra.mxu0 0
        %1104 = vmatprep.subr.bf16.mxu0 0
        %1105 = vmatpush1.bf16.msra.mxu0 0
        %1106 = vmatprep.subr.bf16.mxu0 0
        %1107 = vmatpush1.bf16.msra.mxu0 0
        %1108 = vmatprep.subr.bf16.mxu0 0
        %1109 = vmatpush1.bf16.msra.mxu0 0
        %1110 = vmatprep.subr.bf16.mxu0 0
        %1111 = vmatpush1.bf16.msra.mxu0 0
        %1112 = vmatprep.mubr.bf16.mxu0 0
        %1113 = vmatmul.mubr.bf16.gmra.mrb[0].mxu0 %v1078
        %v1114 = vpop.f32.mrb[0].mxu0
        %v1115 = vadd.f32 0.0, %v1114
        %v1116 = vpop.f32.mrb[0].mxu0
        %v1117 = vadd.f32 0.0, %v1116
        %v1118 = vpop.f32.mrb[0].mxu0
        %v1119 = vadd.f32 0.0, %v1118
        %v1120 = vpop.f32.mrb[0].mxu0
        %v1121 = vadd.f32 0.0, %v1120
        %1122 = vdwg.mxu0
        %v1123 = vadd.f32 %v891, %v1115
        %v1124 = vadd.f32 %v893, %v1117
        %v1125 = vadd.f32 %v895, %v1119
        %v1126 = vadd.f32 %v897, %v1121
        %v1127 = vld [vmem:[%s7] sm:$0xff]
        %v1128 = vld [vmem:[%s7 + $0x8] sm:$0xff]
        %1130 = vset.pattern.permute.xlu0 0
        %1131 = vperm.xlu0 %1130, %v1127
        %v1132 = vpop.permute.xlu0 %1131
        %1135 = vset.pattern.permute.xlu0 0
        %1136 = vperm.xlu0 %1135, %v1128
        %v1137 = vpop.permute.xlu0 %1136
        %v1139 = vadd.f32 %v1123, %v1132
        %v1140 = vadd.f32 %v1124, %v1132
        %v1141 = vadd.f32 %v1125, %v1137
        %v1142 = vadd.f32 %v1126, %v1137
        %v1143 = vmax.f32 %v1139, 0.0
        %v1144 = vmax.f32 %v1140, 0.0
        %v1145 = vmax.f32 %v1141, 0.0
        %v1146 = vmax.f32 %v1142, 0.0
        %v1147 = vld [vmem:[%s8] sm:$0xf]
        %v1148 = vld [vmem:[%s8 + $0x4] sm:$0xf]
        %v1149 = vpack.c.bf16 %v1145, %v1143
        %v1150 = vpack.c.bf16 %v1146, %v1144
        %v1151 = vld [vmem:[%s9] sm:$0xff]
        %v1152 = vld [vmem:[%s9 + $0x8] sm:$0xff]
        %1154 = vset.pattern.permute.xlu0 0
        %1155 = vperm.xlu0 %1154, %v1151
        %v1156 = vpop.permute.xlu0 %1155
        %1159 = vset.pattern.permute.xlu0 0
        %1160 = vperm.xlu0 %1159, %v1152
        %v1161 = vpop.permute.xlu0 %1160
        %v1165 = vunpack.c.l.b16 %v1147
        %v1166 = vunpack.c.l.b16 %v1148
        %v1167 = vpack.c.b16 %v1166, %v1165
        %vm1168 = vcmask 130048
        %v1170 = vsel %vm1168, %v1167, 0
        %1172 = vmatprep.subr.bf16.mxu0 %v1150
        %1173 = vmatpush1.bf16.msra.mxu0 %v1149
        %1174 = vmatprep.subr.bf16.mxu0 0
        %1175 = vmatpush1.bf16.msra.mxu0 0
        %1176 = vmatprep.subr.bf16.mxu0 0
        %1177 = vmatpush1.bf16.msra.mxu0 0
        %1178 = vmatprep.subr.bf16.mxu0 0
        %1179 = vmatpush1.bf16.msra.mxu0 0
        %1180 = vmatprep.subr.bf16.mxu0 0
        %1181 = vmatpush1.bf16.msra.mxu0 0
        %1182 = vmatprep.subr.bf16.mxu0 0
        %1183 = vmatpush1.bf16.msra.mxu0 0
        %1184 = vmatprep.subr.bf16.mxu0 0
        %1185 = vmatpush1.bf16.msra.mxu0 0
        %1186 = vmatprep.subr.bf16.mxu0 0
        %1187 = vmatpush1.bf16.msra.mxu0 0
        %1188 = vmatprep.subr.bf16.mxu0 0
        %1189 = vmatpush1.bf16.msra.mxu0 0
        %1190 = vmatprep.subr.bf16.mxu0 0
        %1191 = vmatpush1.bf16.msra.mxu0 0
        %1192 = vmatprep.subr.bf16.mxu0 0
        %1193 = vmatpush1.bf16.msra.mxu0 0
        %1194 = vmatprep.subr.bf16.mxu0 0
        %1195 = vmatpush1.bf16.msra.mxu0 0
        %1196 = vmatprep.subr.bf16.mxu0 0
        %1197 = vmatpush1.bf16.msra.mxu0 0
        %1198 = vmatprep.subr.bf16.mxu0 0
        %1199 = vmatpush1.bf16.msra.mxu0 0
        %1200 = vmatprep.subr.bf16.mxu0 0
        %1201 = vmatpush1.bf16.msra.mxu0 0
        %1202 = vmatprep.subr.bf16.mxu0 0
        %1203 = vmatpush1.bf16.msra.mxu0 0
        %1204 = vmatprep.mubr.bf16.mxu0 0
        %1205 = vmatmul.mubr.bf16.gmra.mrb[0].mxu0 %v1170
        %v1206 = vpop.f32.mrb[0].mxu0
        %v1207 = vadd.f32 %v1156, %v1206
        %v1208 = vpop.f32.mrb[0].mxu0
        %v1209 = vadd.f32 %v1156, %v1208
        %v1210 = vpop.f32.mrb[0].mxu0
        %v1211 = vadd.f32 %v1161, %v1210
        %v1212 = vpop.f32.mrb[0].mxu0
        %v1213 = vadd.f32 %v1161, %v1212
        %1214 = vdwg.mxu0
        %v1215 = vld [vmem:[%s10] sm:$0xf]
        %v1216 = vld [vmem:[%s10 + $0x4] sm:$0xf]
        %v1217 = vld [vmem:[%s11] sm:$0xff]
        %v1218 = vld [vmem:[%s11 + $0x8] sm:$0xff]
        %1220 = vset.pattern.permute.xlu0 0
        %1221 = vperm.xlu0 %1220, %v1217
        %v1222 = vpop.permute.xlu0 %1221
        %1225 = vset.pattern.permute.xlu0 0
        %1226 = vperm.xlu0 %1225, %v1218
        %v1227 = vpop.permute.xlu0 %1226
        %v1231 = vunpack.c.l.b16 %v1215
        %v1232 = vunpack.c.l.b16 %v1216
        %v1233 = vpack.c.b16 %v1232, %v1231
        %v1235 = vsel %vm442, %v1233, 0
        %1237 = vmatprep.subr.bf16.mxu0 %v451
        %1238 = vmatpush1.bf16.msra.mxu0 %v448
        %1239 = vmatprep.subr.bf16.mxu0 0
        %1240 = vmatpush1.bf16.msra.mxu0 0
        %1241 = vmatprep.subr.bf16.mxu0 0
        %1242 = vmatpush1.bf16.msra.mxu0 0
        %1243 = vmatprep.subr.bf16.mxu0 0
        %1244 = vmatpush1.bf16.msra.mxu0 0
        %1245 = vmatprep.subr.bf16.mxu0 0
        %1246 = vmatpush1.bf16.msra.mxu0 0
        %1247 = vmatprep.subr.bf16.mxu0 0
        %1248 = vmatpush1.bf16.msra.mxu0 0
        %1249 = vmatprep.subr.bf16.mxu0 0
        %1250 = vmatpush1.bf16.msra.mxu0 0
        %1251 = vmatprep.subr.bf16.mxu0 0
        %1252 = vmatpush1.bf16.msra.mxu0 0
        %1253 = vmatprep.subr.bf16.mxu0 0
        %1254 = vmatpush1.bf16.msra.mxu0 0
        %1255 = vmatprep.subr.bf16.mxu0 0
        %1256 = vmatpush1.bf16.msra.mxu0 0
        %1257 = vmatprep.subr.bf16.mxu0 0
        %1258 = vmatpush1.bf16.msra.mxu0 0
        %1259 = vmatprep.subr.bf16.mxu0 0
        %1260 = vmatpush1.bf16.msra.mxu0 0
        %1261 = vmatprep.subr.bf16.mxu0 0
        %1262 = vmatpush1.bf16.msra.mxu0 0
        %1263 = vmatprep.subr.bf16.mxu0 0
        %1264 = vmatpush1.bf16.msra.mxu0 0
        %1265 = vmatprep.subr.bf16.mxu0 0
        %1266 = vmatpush1.bf16.msra.mxu0 0
        %1267 = vmatprep.subr.bf16.mxu0 0
        %1268 = vmatpush1.bf16.msra.mxu0 0
        %1269 = vmatprep.mubr.bf16.mxu0 0
        %1270 = vmatmul.mubr.bf16.gmra.mrb[0].mxu0 %v1235
        %v1271 = vpop.f32.mrb[0].mxu0
        %v1272 = vadd.f32 %v1222, %v1271
        %v1273 = vpop.f32.mrb[0].mxu0
        %v1274 = vadd.f32 %v1222, %v1273
        %v1275 = vpop.f32.mrb[0].mxu0
        %v1276 = vadd.f32 %v1227, %v1275
        %v1277 = vpop.f32.mrb[0].mxu0
        %v1278 = vadd.f32 %v1227, %v1277
        %1279 = vdwg.mxu0
        %v1280 = vadd.f32 %v1207, %v1272
        %v1281 = vadd.f32 %v1209, %v1274
        %v1282 = vadd.f32 %v1211, %v1276
        %v1283 = vadd.f32 %v1213, %v1278
        %v1284 = vmax.f32 %v1280, 0.0
        %v1285 = vmax.f32 %v1281, 0.0
        %v1286 = vmax.f32 %v1282, 0.0
        %v1287 = vmax.f32 %v1283, 0.0
        %v1288 = vpack.c.bf16 %v1286, %v1284
        %v1289 = vpack.c.bf16 %v1287, %v1285
        %v1292 = vunpack.c.l.b16 %v1288
        %v1293 = vunpack.c.l.b16 %v1289
        %v1294 = vunpack.c.h.b16 %v1288
        %v1295 = vunpack.c.h.b16 %v1289
        %v1296 = vpack.c.b16 %v1293, %v1292
        %v1297 = vpack.c.b16 %v1295, %v1294
        %1300 = vst [vmem:[%s406] sm:$0xff] %v1296
        %1301 = vst [vmem:[%s406 + $0x8] sm:$0xff] %v1297
        %s1302 = sand.u32 %s291, 1
        %s1303 = scalar_lea.sflag [#allocation4], %s1302
        %s1304 = sand.u32 %s291, 1
        %s1305 = smul.addr %s1304, 16
        %s1306 = scalar_lea.vmem [#allocation3], %s1305
        // Predicated region
        $region69: #{tpu_custom_call.1} parent=67 // pred_check
          %p1307 = pneg %p301
        $region70: #{tpu_custom_call.1} parent=67 // pred_check_branch
          %1309 = sbr.rel (%p1307) target = $region72
        $region71: #{tpu_custom_call.1} parent=67 // pred_region
          %s1311 = ssub.s32 256, 256
          %1312 = vsyncadd %s1303, %s1311
          %s1313 = smul.addr %s26, 4
          %s1314 = smul.addr %s1313, 64
          %s1315 = scalar_lea.hbm %s12, %s1314
          %s1316 = sshll.u32 %s1306, 4
          %s1317 = int_to_ptr.vmem [resolvable:$true] %s1316
          %1322 = dma.vmem_to_hbm [thread:$0]  %s1317, 256, %s1315, %s1303, 128, 128, 8
        $region72: #{tpu_custom_call.1} parent=67 // pred_fallthru
          _
      $region68: #{tpu_custom_call.1} parent=5 // pred_fallthru
        _
      %p1323 = scmp.le.s32.totalorder 2, %s21
      // Predicated region
      $region73: #{tpu_custom_call.1} parent=5 // pred_check
        %p1324 = pneg %p1323
      $region74: #{tpu_custom_call.1} parent=5 // pred_check_branch
        %1326 = sbr.rel (%p1324) target = $region76
      $region75: #{tpu_custom_call.1} parent=5 // pred_region
        %s1327 = ssub.s32 %s21, 2
        // Predicated region
        $region77: #{tpu_custom_call.1} parent=75 // pred_check
          %p1328 = pneg %p307
        $region78: #{tpu_custom_call.1} parent=75 // pred_check_branch
          %1330 = sbr.rel (%p1328) target = $region80
        $region79: #{tpu_custom_call.1} parent=75 // pred_region
          %s1331 = sand.u32 %s292, 1
          %s1332 = scalar_lea.sflag [#allocation4], %s1331
          %s1333 = sand.u32 %s292, 1
          %s1334 = smul.addr %s1333, 16
          %s1335 = scalar_lea.vmem [#allocation3], %s1334
          %1336 = dma.done %s1332, 256
        $region80: #{tpu_custom_call.1} parent=75 // pred_fallthru
          _
      $region76: #{tpu_custom_call.1} parent=5 // pred_fallthru
        _
    $region6: #{tpu_custom_call.1} parent=1 // loop_footer
      %s25 = sadd.s32 1, %s21
    $region7: #{tpu_custom_call.1} parent=1 // loop_footer_branch
      %20 = sbr.rel target = $region3
    $region8: #{tpu_custom_call.1} parent=1 // loop_exit
      _
    %1337 = vsyncpa [#allocation4], 1
    %s1338 = scalar_lea.sflag [#allocation4], 1
    %1339 = vsyncpa %s1338, 1

</llo_original>
